<compile_context>
chip_gen: v7x
topology: tpu7x:2x2x1
jax: 0.10.0
libtpu: 0.0.40
codegen_flags: <defaults>
</compile_context>

<pallas_src>
import functools
import math

import jax
import jax.numpy as jnp
import numpy as np
from jax.experimental import pallas as pl
from jax.experimental.pallas import tpu as pltpu


def _gru_kernel(x_ref, h0_ref, wx_ref, wh_ref, bx_ref, bhn_ref,
                out_ref, hn_ref, h_scr):
    """One (batch-block, time-chunk) grid step of a fused-gate GRU.

    x_ref  : (TB, TL, Dp)   input chunk (batch-first, zero-padded features)
    h0_ref : (TB, H)        initial hidden state for this batch block
    wx_ref : (Dp, 3H)       fused input weights   [r | z | n]
    wh_ref : (H, 3H)        fused hidden weights  [r | z | n]
    bx_ref : (1, 3H)        [b_ir+b_hr | b_iz+b_hz | b_in]
    bhn_ref: (1, H)         b_hn (the only per-step bias)
    out_ref: (1, TB, TL*H)  per-step hidden states, lane-dense chunk slab
    hn_ref : (TB, H)        final hidden state (written at the last chunk)
    h_scr  : (TB, H) f32    hidden-state carry across time chunks
    """
    t_chunk = pl.program_id(1)
    n_chunks = pl.num_programs(1)

    TB, TL, Dp = x_ref.shape
    H = h0_ref.shape[-1]
    mm_dtype = wh_ref.dtype            # f32, or bf16 on v6e/v7x

    # Initialize the carry at the first time chunk of each batch block.
    @pl.when(t_chunk == 0)
    def _():
        h_scr[...] = h0_ref[...].astype(jnp.float32)

    # --- Hoisted input projection: ONE fused matmul per chunk. ---
    x2d = x_ref[...].reshape(TB * TL, Dp).astype(mm_dtype)
    gx = jnp.dot(x2d, wx_ref[...], preferred_element_type=jnp.float32)
    gx = (gx + bx_ref[...].astype(jnp.float32)).reshape(TB, TL, 3 * H)

    wh = wh_ref[...]
    # Hoisted broadcast (JAX does not CSE broadcast_in_dim inside the loop).
    bhn = jnp.broadcast_to(bhn_ref[...].astype(jnp.float32), (TB, H))

    h = h_scr[...]                     # (TB, H) f32 carry

    # --- Serial recurrence over the chunk: ONE fused h @ Wh per step. ---
    # TODO(synk): at production TB/H sizes switch to lax.fori_loop(unroll=2..4)
    #             to bound vreg live ranges; the static unroll is fine at
    #             small TL/H and keeps the output-store offsets static.
    for t in range(TL):
        gh = jnp.dot(h.astype(mm_dtype), wh, preferred_element_type=jnp.float32)
        r = jax.nn.sigmoid(gx[:, t, 0:H] + gh[:, 0:H])
        z = jax.nn.sigmoid(gx[:, t, H:2 * H] + gh[:, H:2 * H])
        n = jnp.tanh(gx[:, t, 2 * H:3 * H] + r * (gh[:, 2 * H:3 * H] + bhn))
        h = (1.0 - z) * n + z * h
        out_ref[0, :, t * H:(t + 1) * H] = h.astype(out_ref.dtype)

    h_scr[...] = h

    @pl.when(t_chunk == n_chunks - 1)
    def _():
        hn_ref[...] = h.astype(hn_ref.dtype)


@functools.partial(jax.jit,
                   static_argnames=("hidden_size", "time_block", "matmul_dtype"))
def _gru_pallas(x, h0, wx, wh, bx, bhn, *,
                hidden_size, time_block, matmul_dtype):
    """x: (B, L, Dp) batch-first, feature dim already zero-padded.

    Returns (output (B, L, H) f32, hn (1, B, H) f32).
    """
    B, L, Dp = x.shape
    H = hidden_size

    # Batch blocking: split the (embarrassingly parallel) batch axis into two
    # 8-aligned blocks when possible so the "parallel" grid axis can shard the
    # recurrence across v7x's two TensorCores; otherwise take the whole batch
    # (maximizes the M dim of the hoisted projection on v5e/v6e).
    TB = B // 2 if (B % 16 == 0) else B
    TL = time_block
    nb, nt = B // TB, L // TL

    # bf16 MXU inputs (recommended on v6e/v7x): cast activations + weights;
    # accumulation, gate math, the h carry and all outputs remain f32.
    x = x.astype(matmul_dtype)
    wx = wx.astype(matmul_dtype)
    wh = wh.astype(matmul_dtype)

    wmap = lambda b, t: (0, 0)
    grid_spec = pltpu.PrefetchScalarGridSpec(
        num_scalar_prefetch=0,
        grid=(nb, nt),
        in_specs=[
            pl.BlockSpec((TB, TL, Dp), lambda b, t: (b, t, 0)),     # x chunk
            pl.BlockSpec((TB, H), lambda b, t: (b, 0)),             # h0
            pl.BlockSpec((Dp, 3 * H), wmap),                        # fused Wx
            pl.BlockSpec((H, 3 * H), wmap),                         # fused Wh
            pl.BlockSpec((1, 3 * H), wmap),                         # fused x-bias
            pl.BlockSpec((1, H), wmap),                             # b_hn
        ],
        out_specs=(
            pl.BlockSpec((1, TB, TL * H), lambda b, t: (t, b, 0)),  # out slab
            pl.BlockSpec((TB, H), lambda b, t: (b, 0)),             # hn (resident)
        ),
        scratch_shapes=[pltpu.VMEM((TB, H), jnp.float32)],          # h carry
    )

    out_slab, hn = pl.pallas_call(
        _gru_kernel,
        out_shape=(jax.ShapeDtypeStruct((nt, B, TL * H), jnp.float32),
                   jax.ShapeDtypeStruct((B, H), jnp.float32)),
        grid_spec=grid_spec,
        compiler_params=pltpu.CompilerParams(
            dimension_semantics=("parallel", "arbitrary")),
    )(x, h0, wx, wh, bx, bhn)

    # (nt, B, TL*H) -> (B, L, H): layout plumbing outside the kernel so the
    # kernel's per-chunk HBM writeback stays lane-dense.
    out = out_slab.reshape(nt, B, TL, H).transpose(1, 0, 2, 3).reshape(B, L, H)
    return out, hn[None, ...]                                       # (1, B, H)


class ModelBaseRNNRepPallas:
    """JAX/Pallas port of ModelBaseRNNRep (canonical GRU representation)."""

    def __init__(self, obs_shapes, d_action_size, c_action_size,
                 hidden_size=32, time_block=32, matmul_dtype=jnp.float32,
                 seed=0):
        self.obs_shapes = obs_shapes
        self.d_action_size = d_action_size
        self.c_action_size = c_action_size
        self.hidden_size = hidden_size
        self.time_block = time_block
        self.matmul_dtype = matmul_dtype

        obs_dim = sum(int(math.prod(s)) for s in obs_shapes)
        self.input_size = obs_dim + d_action_size + c_action_size
        # Zero-pad the feature dim to a multiple of 128 (lane-dense x DMA,
        # proper MXU K dim).
        self.input_size_padded = ((self.input_size + 127) // 128) * 128

        H, D, Dp = hidden_size, self.input_size, self.input_size_padded
        bound = 1.0 / math.sqrt(H)
        keys = jax.random.split(jax.random.PRNGKey(seed), 12)

        def u(k, shape):
            return jax.random.uniform(k, shape, jnp.float32, -bound, bound)

        # Per-gate parameters (reference semantics), pre-transposed: x @ W, h @ W.
        self.wxr, self.wxz, self.wxn = u(keys[0], (D, H)), u(keys[1], (D, H)), u(keys[2], (D, H))
        self.whr, self.whz, self.whn = u(keys[3], (H, H)), u(keys[4], (H, H)), u(keys[5], (H, H))
        self.b_ir, self.b_iz, self.b_in = u(keys[6], (H,)), u(keys[7], (H,)), u(keys[8], (H,))
        self.b_hr, self.b_hz, self.b_hn = u(keys[9], (H,)), u(keys[10], (H,)), u(keys[11], (H,))

        # Fused + padded kernel parameters.
        wx = jnp.concatenate([self.wxr, self.wxz, self.wxn], axis=1)    # (D, 3H)
        self.wx_fused = jnp.pad(wx, ((0, Dp - D), (0, 0)))              # (Dp, 3H)
        self.wh_fused = jnp.concatenate([self.whr, self.whz, self.whn], axis=1)
        self.bx_fused = jnp.concatenate([self.b_ir + self.b_hr,
                                         self.b_iz + self.b_hz,
                                         self.b_in])[None, :]           # (1, 3H)
        self.bhn_row = self.b_hn[None, :]                               # (1, H)

    def _features(self, obs_list, pre_action):
        B, L = pre_action.shape[0], pre_action.shape[1]
        flat_obs = [o.reshape(B, L, -1) for o in obs_list]
        return jnp.concatenate(flat_obs + [pre_action], axis=-1).astype(jnp.float32)

    def __call__(self, obs_list, pre_action, rnn_state=None):
        x = self._features(obs_list, pre_action)                        # (B, L, D)
        B, L, D = x.shape
        Dp = self.input_size_padded
        if Dp > D:
            x = jnp.pad(x, ((0, 0), (0, 0), (0, Dp - D)))               # lane-dense K

        if rnn_state is None:
            h0 = jnp.zeros((B, self.hidden_size), jnp.float32)
        else:
            h0 = rnn_state[0].astype(jnp.float32)                       # (B, H)

        # Time chunk must divide L and be sublane-aligned (or cover all of L).
        # TODO(synk): generation-aware TL (keep 2*(TB*TL*(Dp+H))*itemsize inside
        #   the scoped-VMEM limit: ~16-24 MiB on v7x, ~2x that on v5e/v6e; set
        #   pltpu.CompilerParams(vmem_limit_bytes=...) when exceeding defaults).
        tl = self.time_block
        if L % tl != 0 or (tl % 8 != 0 and tl != L):
            tl = L

        return _gru_pallas(x, h0, self.wx_fused, self.wh_fused,
                           self.bx_fused, self.bhn_row,
                           hidden_size=self.hidden_size, time_block=tl,
                           matmul_dtype=self.matmul_dtype)

    def reference(self, obs_list, pre_action, rnn_state=None):
        """Pure-JAX nn.GRU reference (unfolded biases, lax.scan over time)."""
        x = self._features(obs_list, pre_action)
        B = x.shape[0]
        h0 = (jnp.zeros((B, self.hidden_size), jnp.float32) if rnn_state is None
              else rnn_state[0].astype(jnp.float32))

        def step(h, x_t):
            r = jax.nn.sigmoid(x_t @ self.wxr + self.b_ir + h @ self.whr + self.b_hr)
            z = jax.nn.sigmoid(x_t @ self.wxz + self.b_iz + h @ self.whz + self.b_hz)
            n = jnp.tanh(x_t @ self.wxn + self.b_in + r * (h @ self.whn + self.b_hn))
            h_new = (1.0 - z) * n + z * h
            return h_new, h_new

        hT, ys = jax.lax.scan(step, h0, jnp.swapaxes(x, 0, 1))
        return jnp.swapaxes(ys, 0, 1), hT[None, ...]

    def get_output_shape(self):
        obs_list = [jnp.zeros((1, 1) + tuple(s), jnp.float32)
                    for s in self.obs_shapes]
        pre_action = jnp.zeros((1, 1, self.d_action_size + self.c_action_size),
                               jnp.float32)
        output, next_rnn_state = self(obs_list, pre_action)
        return (output.shape[-1], next_rnn_state.shape[1:])


if __name__ == "__main__":
    obs_shapes = [(10,), (8,)]
    d_action_size, c_action_size = 3, 2
    B, L, H = 2, 16, 32    # L=16 with time_block=8 exercises the chunked carry

    model = ModelBaseRNNRepPallas(obs_shapes, d_action_size, c_action_size,
                                  hidden_size=H, time_block=8, seed=0)

    key = jax.random.PRNGKey(0)
    k_obs0, k_obs1, k_act, k_h = jax.random.split(key, 4)
    obs_list = [
        jax.random.normal(k_obs0, (B, L) + obs_shapes[0], jnp.float32),
        jax.random.normal(k_obs1, (B, L) + obs_shapes[1], jnp.float32),
    ]
    pre_action = jax.random.normal(
        k_act, (B, L, d_action_size + c_action_size), jnp.float32)
    rnn_state = jax.random.normal(k_h, (1, B, H), jnp.float32)

    output, next_rnn_state = model(obs_list, pre_action, rnn_state)
    jax.block_until_ready((output, next_rnn_state))

    assert output.shape == (B, L, H)
    assert next_rnn_state.shape == (1, B, H)

    # Correctness check against a pure-JAX nn.GRU reference (f32 matmuls).
    ref_out, ref_hn = model.reference(obs_list, pre_action, rnn_state)
    np.testing.assert_allclose(np.asarray(output), np.asarray(ref_out),
                               rtol=2e-3, atol=2e-3)
    np.testing.assert_allclose(np.asarray(next_rnn_state), np.asarray(ref_hn),
                               rtol=2e-3, atol=2e-3)

    # bf16-MXU variant (v6e/v7x path): same weights, looser tolerance.
    model_bf16 = ModelBaseRNNRepPallas(obs_shapes, d_action_size, c_action_size,
                                       hidden_size=H, time_block=8,
                                       matmul_dtype=jnp.bfloat16, seed=0)
    out_bf16, hn_bf16 = model_bf16(obs_list, pre_action, rnn_state)
    jax.block_until_ready((out_bf16, hn_bf16))
    np.testing.assert_allclose(np.asarray(out_bf16), np.asarray(ref_out),
                               rtol=5e-2, atol=5e-2)
    np.testing.assert_allclose(np.asarray(hn_bf16), np.asarray(ref_hn),
                               rtol=5e-2, atol=5e-2)

    # Also exercise the rnn_state=None / L=1 path via get_output_shape.
    out_dim, state_shape = model.get_output_shape()
    assert out_dim == H and tuple(state_shape) == (1, H)

    print("KERNEL_OK")
</pallas_src>

<mosaic_0001>
module attributes {stable_mosaic.version = 11 : i64} {
  func.func @_gru_kernel(%arg0: i32, %arg1: i32, %arg2: memref<2x8x128xf32, #tpu.memory_space<vmem>>, %arg3: memref<2x32xf32, #tpu.memory_space<vmem>>, %arg4: memref<128x96xf32, #tpu.memory_space<vmem>>, %arg5: memref<32x96xf32, #tpu.memory_space<vmem>>, %arg6: memref<1x96xf32, #tpu.memory_space<vmem>>, %arg7: memref<1x32xf32, #tpu.memory_space<vmem>>, %arg8: memref<1x2x256xf32, #tpu.memory_space<vmem>>, %arg9: memref<2x32xf32, #tpu.memory_space<vmem>>, %arg10: memref<2x32xf32, #tpu.memory_space<vmem>>) attributes {dimension_semantics = [#tpu.dimension_semantics<parallel>, #tpu.dimension_semantics<arbitrary>], iteration_bounds = array<i64: 1, 2>, scalar_prefetch = 0 : i64, scratch_operands = 1 : i64, tpu.core_type = #tpu.core_type<tc>, window_params = [{transform_indices = @transform_0, window_bounds = array<i64: 2, 8, 128>}, {transform_indices = @transform_1, window_bounds = array<i64: 2, 32>}, {pipeline_mode = #tpu.pipeline_mode<synchronous>, transform_indices = @transform_2, window_bounds = array<i64: 128, 96>}, {pipeline_mode = #tpu.pipeline_mode<synchronous>, transform_indices = @transform_3, window_bounds = array<i64: 32, 96>}, {pipeline_mode = #tpu.pipeline_mode<synchronous>, transform_indices = @transform_4, window_bounds = array<i64: 1, 96>}, {pipeline_mode = #tpu.pipeline_mode<synchronous>, transform_indices = @transform_5, window_bounds = array<i64: 1, 32>}, {transform_indices = @transform_6, window_bounds = array<i64: 1, 2, 256>}, {transform_indices = @transform_7, window_bounds = array<i64: 2, 32>}]} {
    %c0_i32 = arith.constant 0 : i32
    %0 = arith.cmpi eq, %arg1, %c0_i32 : i32
    %1 = arith.extui %0 : i1 to i32
    %c0_i32_0 = arith.constant 0 : i32
    %2 = arith.cmpi ne, %1, %c0_i32_0 : i32
    scf.if %2 {
      %c0_65 = arith.constant 0 : index
      %c0_66 = arith.constant 0 : index
      %292 = vector.load %arg3[%c0_65, %c0_66] : memref<2x32xf32, #tpu.memory_space<vmem>>, vector<2x32xf32>
      %c0_67 = arith.constant 0 : index
      %c0_68 = arith.constant 0 : index
      %293 = vector.load %arg10[%c0_67, %c0_68] : memref<2x32xf32, #tpu.memory_space<vmem>>, vector<2x32xf32>
      tpu.vector_store %arg10[%c0_67, %c0_68], %292 {strides = array<i32>} : memref<2x32xf32, #tpu.memory_space<vmem>>, vector<2x32xf32>,
    } else {
    }
    %c0 = arith.constant 0 : index
    %c0_1 = arith.constant 0 : index
    %c0_2 = arith.constant 0 : index
    %3 = vector.load %arg2[%c0, %c0_1, %c0_2] : memref<2x8x128xf32, #tpu.memory_space<vmem>>, vector<2x8x128xf32>
    %4 = vector.shape_cast %3 : vector<2x8x128xf32> to vector<16x128xf32>
    %c0_3 = arith.constant 0 : index
    %c0_4 = arith.constant 0 : index
    %5 = vector.load %arg4[%c0_3, %c0_4] : memref<128x96xf32, #tpu.memory_space<vmem>>, vector<128x96xf32>
    %cst = arith.constant dense<0.000000e+00> : vector<16x96xf32>
    %6 = tpu.matmul %4, %5, %cst {dimension_numbers = #tpu.dot_dimension_numbers<[1], [0], [0], [1], [0, 0, 1, 1], [], []>} : vector<16x128xf32>, vector<128x96xf32>, vector<16x96xf32> -> vector<16x96xf32>
    %c0_5 = arith.constant 0 : index
    %c0_6 = arith.constant 0 : index
    %7 = vector.load %arg6[%c0_5, %c0_6] : memref<1x96xf32, #tpu.memory_space<vmem>>, vector<1x96xf32>
    %8 = vector.broadcast %7 : vector<1x96xf32> to vector<16x96xf32>
    %9 = arith.addf %6, %8 : vector<16x96xf32>
    %10 = vector.shape_cast %9 : vector<16x96xf32> to vector<2x8x96xf32>
    %c0_7 = arith.constant 0 : index
    %c0_8 = arith.constant 0 : index
    %11 = vector.load %arg5[%c0_7, %c0_8] : memref<32x96xf32, #tpu.memory_space<vmem>>, vector<32x96xf32>
    %c0_9 = arith.constant 0 : index
    %c0_10 = arith.constant 0 : index
    %12 = vector.load %arg7[%c0_9, %c0_10] : memref<1x32xf32, #tpu.memory_space<vmem>>, vector<1x32xf32>
    %13 = vector.shape_cast %12 : vector<1x32xf32> to vector<1x32xf32>
    %14 = vector.broadcast %13 : vector<1x32xf32> to vector<2x32xf32>
    %c0_11 = arith.constant 0 : index
    %c0_12 = arith.constant 0 : index
    %15 = vector.load %arg10[%c0_11, %c0_12] : memref<2x32xf32, #tpu.memory_space<vmem>>, vector<2x32xf32>
    %cst_13 = arith.constant dense<0.000000e+00> : vector<2x96xf32>
    %16 = tpu.matmul %15, %11, %cst_13 {dimension_numbers = #tpu.dot_dimension_numbers<[1], [0], [0], [1], [0, 0, 1, 1], [], []>} : vector<2x32xf32>, vector<32x96xf32>, vector<2x96xf32> -> vector<2x96xf32>
    %17 = vector.extract_strided_slice %10 {offsets = [0, 0, 0], sizes = [2, 1, 32], strides = [1, 1, 1]} : vector<2x8x96xf32> to vector<2x1x32xf32>
    %18 = vector.shape_cast %17 : vector<2x1x32xf32> to vector<2x32xf32>
    %19 = vector.extract_strided_slice %16 {offsets = [0, 0], sizes = [2, 32], strides = [1, 1]} : vector<2x96xf32> to vector<2x32xf32>
    %20 = arith.addf %18, %19 : vector<2x32xf32>
    %21 = arith.negf %20 : vector<2x32xf32>
    %22 = math.exp %21 : vector<2x32xf32>
    %cst_14 = arith.constant 1.000000e+00 : f32
    %23 = vector.broadcast %cst_14 : f32 to vector<2x32xf32>
    %24 = arith.addf %23, %22 : vector<2x32xf32>
    %25 = arith.divf %23, %24 : vector<2x32xf32>
    %26 = vector.extract_strided_slice %10 {offsets = [0, 0, 32], sizes = [2, 1, 32], strides = [1, 1, 1]} : vector<2x8x96xf32> to vector<2x1x32xf32>
    %27 = vector.shape_cast %26 : vector<2x1x32xf32> to vector<2x32xf32>
    %28 = vector.extract_strided_slice %16 {offsets = [0, 32], sizes = [2, 32], strides = [1, 1]} : vector<2x96xf32> to vector<2x32xf32>
    %29 = arith.addf %27, %28 : vector<2x32xf32>
    %30 = arith.negf %29 : vector<2x32xf32>
    %31 = math.exp %30 : vector<2x32xf32>
    %cst_15 = arith.constant 1.000000e+00 : f32
    %32 = vector.broadcast %cst_15 : f32 to vector<2x32xf32>
    %33 = arith.addf %32, %31 : vector<2x32xf32>
    %34 = arith.divf %32, %33 : vector<2x32xf32>
    %35 = vector.extract_strided_slice %10 {offsets = [0, 0, 64], sizes = [2, 1, 32], strides = [1, 1, 1]} : vector<2x8x96xf32> to vector<2x1x32xf32>
    %36 = vector.shape_cast %35 : vector<2x1x32xf32> to vector<2x32xf32>
    %37 = vector.extract_strided_slice %16 {offsets = [0, 64], sizes = [2, 32], strides = [1, 1]} : vector<2x96xf32> to vector<2x32xf32>
    %38 = arith.addf %37, %14 : vector<2x32xf32>
    %39 = arith.mulf %25, %38 : vector<2x32xf32>
    %40 = arith.addf %36, %39 : vector<2x32xf32>
    %41 = math.tanh %40 : vector<2x32xf32>
    %cst_16 = arith.constant 1.000000e+00 : f32
    %42 = vector.broadcast %cst_16 : f32 to vector<2x32xf32>
    %43 = arith.subf %42, %34 : vector<2x32xf32>
    %44 = arith.mulf %43, %41 : vector<2x32xf32>
    %45 = arith.mulf %34, %15 : vector<2x32xf32>
    %46 = arith.addf %44, %45 : vector<2x32xf32>
    %c0_17 = arith.constant 0 : index
    %c0_18 = arith.constant 0 : index
    %c0_19 = arith.constant 0 : index
    %47 = vector.load %arg8[%c0_17, %c0_18, %c0_19] : memref<1x2x256xf32, #tpu.memory_space<vmem>>, vector<1x2x32xf32>
    %48 = vector.shape_cast %47 : vector<1x2x32xf32> to vector<2x32xf32>
    %49 = vector.shape_cast %46 : vector<2x32xf32> to vector<1x2x32xf32>
    tpu.vector_store %arg8[%c0_17, %c0_18, %c0_19], %49 {strides = array<i32>} : memref<1x2x256xf32, #tpu.memory_space<vmem>>, vector<1x2x32xf32>,
    %cst_20 = arith.constant dense<0.000000e+00> : vector<2x96xf32>
    %50 = tpu.matmul %46, %11, %cst_20 {dimension_numbers = #tpu.dot_dimension_numbers<[1], [0], [0], [1], [0, 0, 1, 1], [], []>} : vector<2x32xf32>, vector<32x96xf32>, vector<2x96xf32> -> vector<2x96xf32>
    %51 = vector.extract_strided_slice %10 {offsets = [0, 1, 0], sizes = [2, 1, 32], strides = [1, 1, 1]} : vector<2x8x96xf32> to vector<2x1x32xf32>
    %52 = vector.shape_cast %51 : vector<2x1x32xf32> to vector<2x32xf32>
    %53 = vector.extract_strided_slice %50 {offsets = [0, 0], sizes = [2, 32], strides = [1, 1]} : vector<2x96xf32> to vector<2x32xf32>
    %54 = arith.addf %52, %53 : vector<2x32xf32>
    %55 = arith.negf %54 : vector<2x32xf32>
    %56 = math.exp %55 : vector<2x32xf32>
    %cst_21 = arith.constant 1.000000e+00 : f32
    %57 = vector.broadcast %cst_21 : f32 to vector<2x32xf32>
    %58 = arith.addf %57, %56 : vector<2x32xf32>
    %59 = arith.divf %57, %58 : vector<2x32xf32>
    %60 = vector.extract_strided_slice %10 {offsets = [0, 1, 32], sizes = [2, 1, 32], strides = [1, 1, 1]} : vector<2x8x96xf32> to vector<2x1x32xf32>
    %61 = vector.shape_cast %60 : vector<2x1x32xf32> to vector<2x32xf32>
    %62 = vector.extract_strided_slice %50 {offsets = [0, 32], sizes = [2, 32], strides = [1, 1]} : vector<2x96xf32> to vector<2x32xf32>
    %63 = arith.addf %61, %62 : vector<2x32xf32>
    %64 = arith.negf %63 : vector<2x32xf32>
    %65 = math.exp %64 : vector<2x32xf32>
    %cst_22 = arith.constant 1.000000e+00 : f32
    %66 = vector.broadcast %cst_22 : f32 to vector<2x32xf32>
    %67 = arith.addf %66, %65 : vector<2x32xf32>
    %68 = arith.divf %66, %67 : vector<2x32xf32>
    %69 = vector.extract_strided_slice %10 {offsets = [0, 1, 64], sizes = [2, 1, 32], strides = [1, 1, 1]} : vector<2x8x96xf32> to vector<2x1x32xf32>
    %70 = vector.shape_cast %69 : vector<2x1x32xf32> to vector<2x32xf32>
    %71 = vector.extract_strided_slice %50 {offsets = [0, 64], sizes = [2, 32], strides = [1, 1]} : vector<2x96xf32> to vector<2x32xf32>
    %72 = arith.addf %71, %14 : vector<2x32xf32>
    %73 = arith.mulf %59, %72 : vector<2x32xf32>
    %74 = arith.addf %70, %73 : vector<2x32xf32>
    %75 = math.tanh %74 : vector<2x32xf32>
    %cst_23 = arith.constant 1.000000e+00 : f32
    %76 = vector.broadcast %cst_23 : f32 to vector<2x32xf32>
    %77 = arith.subf %76, %68 : vector<2x32xf32>
    %78 = arith.mulf %77, %75 : vector<2x32xf32>
    %79 = arith.mulf %68, %46 : vector<2x32xf32>
    %80 = arith.addf %78, %79 : vector<2x32xf32>
    %c0_24 = arith.constant 0 : index
    %c0_25 = arith.constant 0 : index
    %c32 = arith.constant 32 : index
    %81 = vector.load %arg8[%c0_24, %c0_25, %c32] : memref<1x2x256xf32, #tpu.memory_space<vmem>>, vector<1x2x32xf32>
    %82 = vector.shape_cast %81 : vector<1x2x32xf32> to vector<2x32xf32>
    %83 = vector.shape_cast %80 : vector<2x32xf32> to vector<1x2x32xf32>
    tpu.vector_store %arg8[%c0_24, %c0_25, %c32], %83 {strides = array<i32>} : memref<1x2x256xf32, #tpu.memory_space<vmem>>, vector<1x2x32xf32>,
    %cst_26 = arith.constant dense<0.000000e+00> : vector<2x96xf32>
    %84 = tpu.matmul %80, %11, %cst_26 {dimension_numbers = #tpu.dot_dimension_numbers<[1], [0], [0], [1], [0, 0, 1, 1], [], []>} : vector<2x32xf32>, vector<32x96xf32>, vector<2x96xf32> -> vector<2x96xf32>
    %85 = vector.extract_strided_slice %10 {offsets = [0, 2, 0], sizes = [2, 1, 32], strides = [1, 1, 1]} : vector<2x8x96xf32> to vector<2x1x32xf32>
    %86 = vector.shape_cast %85 : vector<2x1x32xf32> to vector<2x32xf32>
    %87 = vector.extract_strided_slice %84 {offsets = [0, 0], sizes = [2, 32], strides = [1, 1]} : vector<2x96xf32> to vector<2x32xf32>
    %88 = arith.addf %86, %87 : vector<2x32xf32>
    %89 = arith.negf %88 : vector<2x32xf32>
    %90 = math.exp %89 : vector<2x32xf32>
    %cst_27 = arith.constant 1.000000e+00 : f32
    %91 = vector.broadcast %cst_27 : f32 to vector<2x32xf32>
    %92 = arith.addf %91, %90 : vector<2x32xf32>
    %93 = arith.divf %91, %92 : vector<2x32xf32>
    %94 = vector.extract_strided_slice %10 {offsets = [0, 2, 32], sizes = [2, 1, 32], strides = [1, 1, 1]} : vector<2x8x96xf32> to vector<2x1x32xf32>
    %95 = vector.shape_cast %94 : vector<2x1x32xf32> to vector<2x32xf32>
    %96 = vector.extract_strided_slice %84 {offsets = [0, 32], sizes = [2, 32], strides = [1, 1]} : vector<2x96xf32> to vector<2x32xf32>
    %97 = arith.addf %95, %96 : vector<2x32xf32>
    %98 = arith.negf %97 : vector<2x32xf32>
    %99 = math.exp %98 : vector<2x32xf32>
    %cst_28 = arith.constant 1.000000e+00 : f32
    %100 = vector.broadcast %cst_28 : f32 to vector<2x32xf32>
    %101 = arith.addf %100, %99 : vector<2x32xf32>
    %102 = arith.divf %100, %101 : vector<2x32xf32>
    %103 = vector.extract_strided_slice %10 {offsets = [0, 2, 64], sizes = [2, 1, 32], strides = [1, 1, 1]} : vector<2x8x96xf32> to vector<2x1x32xf32>
    %104 = vector.shape_cast %103 : vector<2x1x32xf32> to vector<2x32xf32>
    %105 = vector.extract_strided_slice %84 {offsets = [0, 64], sizes = [2, 32], strides = [1, 1]} : vector<2x96xf32> to vector<2x32xf32>
    %106 = arith.addf %105, %14 : vector<2x32xf32>
    %107 = arith.mulf %93, %106 : vector<2x32xf32>
    %108 = arith.addf %104, %107 : vector<2x32xf32>
    %109 = math.tanh %108 : vector<2x32xf32>
    %cst_29 = arith.constant 1.000000e+00 : f32
    %110 = vector.broadcast %cst_29 : f32 to vector<2x32xf32>
    %111 = arith.subf %110, %102 : vector<2x32xf32>
    %112 = arith.mulf %111, %109 : vector<2x32xf32>
    %113 = arith.mulf %102, %80 : vector<2x32xf32>
    %114 = arith.addf %112, %113 : vector<2x32xf32>
    %c0_30 = arith.constant 0 : index
    %c0_31 = arith.constant 0 : index
    %c64 = arith.constant 64 : index
    %115 = vector.load %arg8[%c0_30, %c0_31, %c64] : memref<1x2x256xf32, #tpu.memory_space<vmem>>, vector<1x2x32xf32>
    %116 = vector.shape_cast %115 : vector<1x2x32xf32> to vector<2x32xf32>
    %117 = vector.shape_cast %114 : vector<2x32xf32> to vector<1x2x32xf32>
    tpu.vector_store %arg8[%c0_30, %c0_31, %c64], %117 {strides = array<i32>} : memref<1x2x256xf32, #tpu.memory_space<vmem>>, vector<1x2x32xf32>,
    %cst_32 = arith.constant dense<0.000000e+00> : vector<2x96xf32>
    %118 = tpu.matmul %114, %11, %cst_32 {dimension_numbers = #tpu.dot_dimension_numbers<[1], [0], [0], [1], [0, 0, 1, 1], [], []>} : vector<2x32xf32>, vector<32x96xf32>, vector<2x96xf32> -> vector<2x96xf32>
    %119 = vector.extract_strided_slice %10 {offsets = [0, 3, 0], sizes = [2, 1, 32], strides = [1, 1, 1]} : vector<2x8x96xf32> to vector<2x1x32xf32>
    %120 = vector.shape_cast %119 : vector<2x1x32xf32> to vector<2x32xf32>
    %121 = vector.extract_strided_slice %118 {offsets = [0, 0], sizes = [2, 32], strides = [1, 1]} : vector<2x96xf32> to vector<2x32xf32>
    %122 = arith.addf %120, %121 : vector<2x32xf32>
    %123 = arith.negf %122 : vector<2x32xf32>
    %124 = math.exp %123 : vector<2x32xf32>
    %cst_33 = arith.constant 1.000000e+00 : f32
    %125 = vector.broadcast %cst_33 : f32 to vector<2x32xf32>
    %126 = arith.addf %125, %124 : vector<2x32xf32>
    %127 = arith.divf %125, %126 : vector<2x32xf32>
    %128 = vector.extract_strided_slice %10 {offsets = [0, 3, 32], sizes = [2, 1, 32], strides = [1, 1, 1]} : vector<2x8x96xf32> to vector<2x1x32xf32>
    %129 = vector.shape_cast %128 : vector<2x1x32xf32> to vector<2x32xf32>
    %130 = vector.extract_strided_slice %118 {offsets = [0, 32], sizes = [2, 32], strides = [1, 1]} : vector<2x96xf32> to vector<2x32xf32>
    %131 = arith.addf %129, %130 : vector<2x32xf32>
    %132 = arith.negf %131 : vector<2x32xf32>
    %133 = math.exp %132 : vector<2x32xf32>
    %cst_34 = arith.constant 1.000000e+00 : f32
    %134 = vector.broadcast %cst_34 : f32 to vector<2x32xf32>
    %135 = arith.addf %134, %133 : vector<2x32xf32>
    %136 = arith.divf %134, %135 : vector<2x32xf32>
    %137 = vector.extract_strided_slice %10 {offsets = [0, 3, 64], sizes = [2, 1, 32], strides = [1, 1, 1]} : vector<2x8x96xf32> to vector<2x1x32xf32>
    %138 = vector.shape_cast %137 : vector<2x1x32xf32> to vector<2x32xf32>
    %139 = vector.extract_strided_slice %118 {offsets = [0, 64], sizes = [2, 32], strides = [1, 1]} : vector<2x96xf32> to vector<2x32xf32>
    %140 = arith.addf %139, %14 : vector<2x32xf32>
    %141 = arith.mulf %127, %140 : vector<2x32xf32>
    %142 = arith.addf %138, %141 : vector<2x32xf32>
    %143 = math.tanh %142 : vector<2x32xf32>
    %cst_35 = arith.constant 1.000000e+00 : f32
    %144 = vector.broadcast %cst_35 : f32 to vector<2x32xf32>
    %145 = arith.subf %144, %136 : vector<2x32xf32>
    %146 = arith.mulf %145, %143 : vector<2x32xf32>
    %147 = arith.mulf %136, %114 : vector<2x32xf32>
    %148 = arith.addf %146, %147 : vector<2x32xf32>
    %c0_36 = arith.constant 0 : index
    %c0_37 = arith.constant 0 : index
    %c96 = arith.constant 96 : index
    %149 = vector.load %arg8[%c0_36, %c0_37, %c96] : memref<1x2x256xf32, #tpu.memory_space<vmem>>, vector<1x2x32xf32>
    %150 = vector.shape_cast %149 : vector<1x2x32xf32> to vector<2x32xf32>
    %151 = vector.shape_cast %148 : vector<2x32xf32> to vector<1x2x32xf32>
    tpu.vector_store %arg8[%c0_36, %c0_37, %c96], %151 {strides = array<i32>} : memref<1x2x256xf32, #tpu.memory_space<vmem>>, vector<1x2x32xf32>,
    %cst_38 = arith.constant dense<0.000000e+00> : vector<2x96xf32>
    %152 = tpu.matmul %148, %11, %cst_38 {dimension_numbers = #tpu.dot_dimension_numbers<[1], [0], [0], [1], [0, 0, 1, 1], [], []>} : vector<2x32xf32>, vector<32x96xf32>, vector<2x96xf32> -> vector<2x96xf32>
    %153 = vector.extract_strided_slice %10 {offsets = [0, 4, 0], sizes = [2, 1, 32], strides = [1, 1, 1]} : vector<2x8x96xf32> to vector<2x1x32xf32>
    %154 = vector.shape_cast %153 : vector<2x1x32xf32> to vector<2x32xf32>
    %155 = vector.extract_strided_slice %152 {offsets = [0, 0], sizes = [2, 32], strides = [1, 1]} : vector<2x96xf32> to vector<2x32xf32>
    %156 = arith.addf %154, %155 : vector<2x32xf32>
    %157 = arith.negf %156 : vector<2x32xf32>
    %158 = math.exp %157 : vector<2x32xf32>
    %cst_39 = arith.constant 1.000000e+00 : f32
    %159 = vector.broadcast %cst_39 : f32 to vector<2x32xf32>
    %160 = arith.addf %159, %158 : vector<2x32xf32>
    %161 = arith.divf %159, %160 : vector<2x32xf32>
    %162 = vector.extract_strided_slice %10 {offsets = [0, 4, 32], sizes = [2, 1, 32], strides = [1, 1, 1]} : vector<2x8x96xf32> to vector<2x1x32xf32>
    %163 = vector.shape_cast %162 : vector<2x1x32xf32> to vector<2x32xf32>
    %164 = vector.extract_strided_slice %152 {offsets = [0, 32], sizes = [2, 32], strides = [1, 1]} : vector<2x96xf32> to vector<2x32xf32>
    %165 = arith.addf %163, %164 : vector<2x32xf32>
    %166 = arith.negf %165 : vector<2x32xf32>
    %167 = math.exp %166 : vector<2x32xf32>
    %cst_40 = arith.constant 1.000000e+00 : f32
    %168 = vector.broadcast %cst_40 : f32 to vector<2x32xf32>
    %169 = arith.addf %168, %167 : vector<2x32xf32>
    %170 = arith.divf %168, %169 : vector<2x32xf32>
    %171 = vector.extract_strided_slice %10 {offsets = [0, 4, 64], sizes = [2, 1, 32], strides = [1, 1, 1]} : vector<2x8x96xf32> to vector<2x1x32xf32>
    %172 = vector.shape_cast %171 : vector<2x1x32xf32> to vector<2x32xf32>
    %173 = vector.extract_strided_slice %152 {offsets = [0, 64], sizes = [2, 32], strides = [1, 1]} : vector<2x96xf32> to vector<2x32xf32>
    %174 = arith.addf %173, %14 : vector<2x32xf32>
    %175 = arith.mulf %161, %174 : vector<2x32xf32>
    %176 = arith.addf %172, %175 : vector<2x32xf32>
    %177 = math.tanh %176 : vector<2x32xf32>
    %cst_41 = arith.constant 1.000000e+00 : f32
    %178 = vector.broadcast %cst_41 : f32 to vector<2x32xf32>
    %179 = arith.subf %178, %170 : vector<2x32xf32>
    %180 = arith.mulf %179, %177 : vector<2x32xf32>
    %181 = arith.mulf %170, %148 : vector<2x32xf32>
    %182 = arith.addf %180, %181 : vector<2x32xf32>
    %c0_42 = arith.constant 0 : index
    %c0_43 = arith.constant 0 : index
    %c128 = arith.constant 128 : index
    %183 = vector.load %arg8[%c0_42, %c0_43, %c128] : memref<1x2x256xf32, #tpu.memory_space<vmem>>, vector<1x2x32xf32>
    %184 = vector.shape_cast %183 : vector<1x2x32xf32> to vector<2x32xf32>
    %185 = vector.shape_cast %182 : vector<2x32xf32> to vector<1x2x32xf32>
    tpu.vector_store %arg8[%c0_42, %c0_43, %c128], %185 {strides = array<i32>} : memref<1x2x256xf32, #tpu.memory_space<vmem>>, vector<1x2x32xf32>,
    %cst_44 = arith.constant dense<0.000000e+00> : vector<2x96xf32>
    %186 = tpu.matmul %182, %11, %cst_44 {dimension_numbers = #tpu.dot_dimension_numbers<[1], [0], [0], [1], [0, 0, 1, 1], [], []>} : vector<2x32xf32>, vector<32x96xf32>, vector<2x96xf32> -> vector<2x96xf32>
    %187 = vector.extract_strided_slice %10 {offsets = [0, 5, 0], sizes = [2, 1, 32], strides = [1, 1, 1]} : vector<2x8x96xf32> to vector<2x1x32xf32>
    %188 = vector.shape_cast %187 : vector<2x1x32xf32> to vector<2x32xf32>
    %189 = vector.extract_strided_slice %186 {offsets = [0, 0], sizes = [2, 32], strides = [1, 1]} : vector<2x96xf32> to vector<2x32xf32>
    %190 = arith.addf %188, %189 : vector<2x32xf32>
    %191 = arith.negf %190 : vector<2x32xf32>
    %192 = math.exp %191 : vector<2x32xf32>
    %cst_45 = arith.constant 1.000000e+00 : f32
    %193 = vector.broadcast %cst_45 : f32 to vector<2x32xf32>
    %194 = arith.addf %193, %192 : vector<2x32xf32>
    %195 = arith.divf %193, %194 : vector<2x32xf32>
    %196 = vector.extract_strided_slice %10 {offsets = [0, 5, 32], sizes = [2, 1, 32], strides = [1, 1, 1]} : vector<2x8x96xf32> to vector<2x1x32xf32>
    %197 = vector.shape_cast %196 : vector<2x1x32xf32> to vector<2x32xf32>
    %198 = vector.extract_strided_slice %186 {offsets = [0, 32], sizes = [2, 32], strides = [1, 1]} : vector<2x96xf32> to vector<2x32xf32>
    %199 = arith.addf %197, %198 : vector<2x32xf32>
    %200 = arith.negf %199 : vector<2x32xf32>
    %201 = math.exp %200 : vector<2x32xf32>
    %cst_46 = arith.constant 1.000000e+00 : f32
    %202 = vector.broadcast %cst_46 : f32 to vector<2x32xf32>
    %203 = arith.addf %202, %201 : vector<2x32xf32>
    %204 = arith.divf %202, %203 : vector<2x32xf32>
    %205 = vector.extract_strided_slice %10 {offsets = [0, 5, 64], sizes = [2, 1, 32], strides = [1, 1, 1]} : vector<2x8x96xf32> to vector<2x1x32xf32>
    %206 = vector.shape_cast %205 : vector<2x1x32xf32> to vector<2x32xf32>
    %207 = vector.extract_strided_slice %186 {offsets = [0, 64], sizes = [2, 32], strides = [1, 1]} : vector<2x96xf32> to vector<2x32xf32>
    %208 = arith.addf %207, %14 : vector<2x32xf32>
    %209 = arith.mulf %195, %208 : vector<2x32xf32>
    %210 = arith.addf %206, %209 : vector<2x32xf32>
    %211 = math.tanh %210 : vector<2x32xf32>
    %cst_47 = arith.constant 1.000000e+00 : f32
    %212 = vector.broadcast %cst_47 : f32 to vector<2x32xf32>
    %213 = arith.subf %212, %204 : vector<2x32xf32>
    %214 = arith.mulf %213, %211 : vector<2x32xf32>
    %215 = arith.mulf %204, %182 : vector<2x32xf32>
    %216 = arith.addf %214, %215 : vector<2x32xf32>
    %c0_48 = arith.constant 0 : index
    %c0_49 = arith.constant 0 : index
    %c160 = arith.constant 160 : index
    %217 = vector.load %arg8[%c0_48, %c0_49, %c160] : memref<1x2x256xf32, #tpu.memory_space<vmem>>, vector<1x2x32xf32>
    %218 = vector.shape_cast %217 : vector<1x2x32xf32> to vector<2x32xf32>
    %219 = vector.shape_cast %216 : vector<2x32xf32> to vector<1x2x32xf32>
    tpu.vector_store %arg8[%c0_48, %c0_49, %c160], %219 {strides = array<i32>} : memref<1x2x256xf32, #tpu.memory_space<vmem>>, vector<1x2x32xf32>,
    %cst_50 = arith.constant dense<0.000000e+00> : vector<2x96xf32>
    %220 = tpu.matmul %216, %11, %cst_50 {dimension_numbers = #tpu.dot_dimension_numbers<[1], [0], [0], [1], [0, 0, 1, 1], [], []>} : vector<2x32xf32>, vector<32x96xf32>, vector<2x96xf32> -> vector<2x96xf32>
    %221 = vector.extract_strided_slice %10 {offsets = [0, 6, 0], sizes = [2, 1, 32], strides = [1, 1, 1]} : vector<2x8x96xf32> to vector<2x1x32xf32>
    %222 = vector.shape_cast %221 : vector<2x1x32xf32> to vector<2x32xf32>
    %223 = vector.extract_strided_slice %220 {offsets = [0, 0], sizes = [2, 32], strides = [1, 1]} : vector<2x96xf32> to vector<2x32xf32>
    %224 = arith.addf %222, %223 : vector<2x32xf32>
    %225 = arith.negf %224 : vector<2x32xf32>
    %226 = math.exp %225 : vector<2x32xf32>
    %cst_51 = arith.constant 1.000000e+00 : f32
    %227 = vector.broadcast %cst_51 : f32 to vector<2x32xf32>
    %228 = arith.addf %227, %226 : vector<2x32xf32>
    %229 = arith.divf %227, %228 : vector<2x32xf32>
    %230 = vector.extract_strided_slice %10 {offsets = [0, 6, 32], sizes = [2, 1, 32], strides = [1, 1, 1]} : vector<2x8x96xf32> to vector<2x1x32xf32>
    %231 = vector.shape_cast %230 : vector<2x1x32xf32> to vector<2x32xf32>
    %232 = vector.extract_strided_slice %220 {offsets = [0, 32], sizes = [2, 32], strides = [1, 1]} : vector<2x96xf32> to vector<2x32xf32>
    %233 = arith.addf %231, %232 : vector<2x32xf32>
    %234 = arith.negf %233 : vector<2x32xf32>
    %235 = math.exp %234 : vector<2x32xf32>
    %cst_52 = arith.constant 1.000000e+00 : f32
    %236 = vector.broadcast %cst_52 : f32 to vector<2x32xf32>
    %237 = arith.addf %236, %235 : vector<2x32xf32>
    %238 = arith.divf %236, %237 : vector<2x32xf32>
    %239 = vector.extract_strided_slice %10 {offsets = [0, 6, 64], sizes = [2, 1, 32], strides = [1, 1, 1]} : vector<2x8x96xf32> to vector<2x1x32xf32>
    %240 = vector.shape_cast %239 : vector<2x1x32xf32> to vector<2x32xf32>
    %241 = vector.extract_strided_slice %220 {offsets = [0, 64], sizes = [2, 32], strides = [1, 1]} : vector<2x96xf32> to vector<2x32xf32>
    %242 = arith.addf %241, %14 : vector<2x32xf32>
    %243 = arith.mulf %229, %242 : vector<2x32xf32>
    %244 = arith.addf %240, %243 : vector<2x32xf32>
    %245 = math.tanh %244 : vector<2x32xf32>
    %cst_53 = arith.constant 1.000000e+00 : f32
    %246 = vector.broadcast %cst_53 : f32 to vector<2x32xf32>
    %247 = arith.subf %246, %238 : vector<2x32xf32>
    %248 = arith.mulf %247, %245 : vector<2x32xf32>
    %249 = arith.mulf %238, %216 : vector<2x32xf32>
    %250 = arith.addf %248, %249 : vector<2x32xf32>
    %c0_54 = arith.constant 0 : index
    %c0_55 = arith.constant 0 : index
    %c192 = arith.constant 192 : index
    %251 = vector.load %arg8[%c0_54, %c0_55, %c192] : memref<1x2x256xf32, #tpu.memory_space<vmem>>, vector<1x2x32xf32>
    %252 = vector.shape_cast %251 : vector<1x2x32xf32> to vector<2x32xf32>
    %253 = vector.shape_cast %250 : vector<2x32xf32> to vector<1x2x32xf32>
    tpu.vector_store %arg8[%c0_54, %c0_55, %c192], %253 {strides = array<i32>} : memref<1x2x256xf32, #tpu.memory_space<vmem>>, vector<1x2x32xf32>,
    %cst_56 = arith.constant dense<0.000000e+00> : vector<2x96xf32>
    %254 = tpu.matmul %250, %11, %cst_56 {dimension_numbers = #tpu.dot_dimension_numbers<[1], [0], [0], [1], [0, 0, 1, 1], [], []>} : vector<2x32xf32>, vector<32x96xf32>, vector<2x96xf32> -> vector<2x96xf32>
    %255 = vector.extract_strided_slice %10 {offsets = [0, 7, 0], sizes = [2, 1, 32], strides = [1, 1, 1]} : vector<2x8x96xf32> to vector<2x1x32xf32>
    %256 = vector.shape_cast %255 : vector<2x1x32xf32> to vector<2x32xf32>
    %257 = vector.extract_strided_slice %254 {offsets = [0, 0], sizes = [2, 32], strides = [1, 1]} : vector<2x96xf32> to vector<2x32xf32>
    %258 = arith.addf %256, %257 : vector<2x32xf32>
    %259 = arith.negf %258 : vector<2x32xf32>
    %260 = math.exp %259 : vector<2x32xf32>
    %cst_57 = arith.constant 1.000000e+00 : f32
    %261 = vector.broadcast %cst_57 : f32 to vector<2x32xf32>
    %262 = arith.addf %261, %260 : vector<2x32xf32>
    %263 = arith.divf %261, %262 : vector<2x32xf32>
    %264 = vector.extract_strided_slice %10 {offsets = [0, 7, 32], sizes = [2, 1, 32], strides = [1, 1, 1]} : vector<2x8x96xf32> to vector<2x1x32xf32>
    %265 = vector.shape_cast %264 : vector<2x1x32xf32> to vector<2x32xf32>
    %266 = vector.extract_strided_slice %254 {offsets = [0, 32], sizes = [2, 32], strides = [1, 1]} : vector<2x96xf32> to vector<2x32xf32>
    %267 = arith.addf %265, %266 : vector<2x32xf32>
    %268 = arith.negf %267 : vector<2x32xf32>
    %269 = math.exp %268 : vector<2x32xf32>
    %cst_58 = arith.constant 1.000000e+00 : f32
    %270 = vector.broadcast %cst_58 : f32 to vector<2x32xf32>
    %271 = arith.addf %270, %269 : vector<2x32xf32>
    %272 = arith.divf %270, %271 : vector<2x32xf32>
    %273 = vector.extract_strided_slice %10 {offsets = [0, 7, 64], sizes = [2, 1, 32], strides = [1, 1, 1]} : vector<2x8x96xf32> to vector<2x1x32xf32>
    %274 = vector.shape_cast %273 : vector<2x1x32xf32> to vector<2x32xf32>
    %275 = vector.extract_strided_slice %254 {offsets = [0, 64], sizes = [2, 32], strides = [1, 1]} : vector<2x96xf32> to vector<2x32xf32>
    %276 = arith.addf %275, %14 : vector<2x32xf32>
    %277 = arith.mulf %263, %276 : vector<2x32xf32>
    %278 = arith.addf %274, %277 : vector<2x32xf32>
    %279 = math.tanh %278 : vector<2x32xf32>
    %cst_59 = arith.constant 1.000000e+00 : f32
    %280 = vector.broadcast %cst_59 : f32 to vector<2x32xf32>
    %281 = arith.subf %280, %272 : vector<2x32xf32>
    %282 = arith.mulf %281, %279 : vector<2x32xf32>
    %283 = arith.mulf %272, %250 : vector<2x32xf32>
    %284 = arith.addf %282, %283 : vector<2x32xf32>
    %c0_60 = arith.constant 0 : index
    %c0_61 = arith.constant 0 : index
    %c224 = arith.constant 224 : index
    %285 = vector.load %arg8[%c0_60, %c0_61, %c224] : memref<1x2x256xf32, #tpu.memory_space<vmem>>, vector<1x2x32xf32>
    %286 = vector.shape_cast %285 : vector<1x2x32xf32> to vector<2x32xf32>
    %287 = vector.shape_cast %284 : vector<2x32xf32> to vector<1x2x32xf32>
    tpu.vector_store %arg8[%c0_60, %c0_61, %c224], %287 {strides = array<i32>} : memref<1x2x256xf32, #tpu.memory_space<vmem>>, vector<1x2x32xf32>,
    %c0_62 = arith.constant 0 : index
    %c0_63 = arith.constant 0 : index
    %288 = vector.load %arg10[%c0_62, %c0_63] : memref<2x32xf32, #tpu.memory_space<vmem>>, vector<2x32xf32>
    tpu.vector_store %arg10[%c0_62, %c0_63], %284 {strides = array<i32>} : memref<2x32xf32, #tpu.memory_space<vmem>>, vector<2x32xf32>,
    %c1_i32 = arith.constant 1 : i32
    %289 = arith.cmpi eq, %arg1, %c1_i32 : i32
    %290 = arith.extui %289 : i1 to i32
    %c0_i32_64 = arith.constant 0 : i32
    %291 = arith.cmpi ne, %290, %c0_i32_64 : i32
    scf.if %291 {
      %c0_65 = arith.constant 0 : index
      %c0_66 = arith.constant 0 : index
      %292 = vector.load %arg9[%c0_65, %c0_66] : memref<2x32xf32, #tpu.memory_space<vmem>>, vector<2x32xf32>
      tpu.vector_store %arg9[%c0_65, %c0_66], %284 {strides = array<i32>} : memref<2x32xf32, #tpu.memory_space<vmem>>, vector<2x32xf32>,
    } else {
    }
    return
  }
  func.func @transform_0(%arg0: i32, %arg1: i32) -> (i32, i32, i32) {
    %c0_i32 = arith.constant 0 : i32
    %c0_i32_0 = arith.constant 0 : i32
    return %arg0, %arg1, %c0_i32 : i32, i32, i32
  }
  func.func @transform_1(%arg0: i32, %arg1: i32) -> (i32, i32) {
    %c0_i32 = arith.constant 0 : i32
    %c0_i32_0 = arith.constant 0 : i32
    return %arg0, %c0_i32 : i32, i32
  }
  func.func @transform_2(%arg0: i32, %arg1: i32) -> (i32, i32) {
    %c0_i32 = arith.constant 0 : i32
    %c0_i32_0 = arith.constant 0 : i32
    %c0_i32_1 = arith.constant 0 : i32
    return %c0_i32, %c0_i32_0 : i32, i32
  }
  func.func @transform_3(%arg0: i32, %arg1: i32) -> (i32, i32) {
    %c0_i32 = arith.constant 0 : i32
    %c0_i32_0 = arith.constant 0 : i32
    %c0_i32_1 = arith.constant 0 : i32
    return %c0_i32, %c0_i32_0 : i32, i32
  }
  func.func @transform_4(%arg0: i32, %arg1: i32) -> (i32, i32) {
    %c0_i32 = arith.constant 0 : i32
    %c0_i32_0 = arith.constant 0 : i32
    %c0_i32_1 = arith.constant 0 : i32
    return %c0_i32, %c0_i32_0 : i32, i32
  }
  func.func @transform_5(%arg0: i32, %arg1: i32) -> (i32, i32) {
    %c0_i32 = arith.constant 0 : i32
    %c0_i32_0 = arith.constant 0 : i32
    %c0_i32_1 = arith.constant 0 : i32
    return %c0_i32, %c0_i32_0 : i32, i32
  }
  func.func @transform_6(%arg0: i32, %arg1: i32) -> (i32, i32, i32) {
    %c0_i32 = arith.constant 0 : i32
    %c0_i32_0 = arith.constant 0 : i32
    return %arg1, %arg0, %c0_i32 : i32, i32, i32
  }
  func.func @transform_7(%arg0: i32, %arg1: i32) -> (i32, i32) {
    %c0_i32 = arith.constant 0 : i32
    %c0_i32_0 = arith.constant 0 : i32
    return %arg0, %c0_i32 : i32, i32
  }
}

</mosaic_0001>

<llo_original>
// kernel: _gru_pallas.1
$region0: #{_gru_pallas.1}
  #allocation0 [shape = 'u32[]', space=smem, size = 0x4, offset = 0x4, fixed_abs, tag = 'smem constant byte address 0x4 - core index']
  #allocation1 [shape = 'u32[144,128]{1,0:T(1,128)}', space=vmem, size = 0x12000, scoped, tag = 'internal scratch']
  #allocation2 [shape = 'f32[2,32]{1,0:T(2,128)}', space=vmem, size = 0x400, scoped, tag = 'scratch operand']
  %s0 = inlined_call_operand.vmem [shape: f32[2,16,128], index: 0, kind: input, shape index: {}]
  %s1 = inlined_call_operand.vmem [shape: f32[2,32], index: 1, kind: input, shape index: {}]
  %s2 = inlined_call_operand.vmem [shape: f32[128,96], index: 2, kind: input, shape index: {}]
  %s3 = inlined_call_operand.vmem [shape: f32[32,96], index: 3, kind: input, shape index: {}]
  %s4 = inlined_call_operand.vmem [shape: f32[1,96], index: 4, kind: input, shape index: {}]
  %s5 = inlined_call_operand.vmem [shape: f32[1,32], index: 5, kind: input, shape index: {}]
  %s6 = inlined_call_operand.vmem [shape: f32[2,2,256], index: 6, kind: output, shape index: {0}]
  %s7 = inlined_call_operand.hbm [shape: f32[2,32], index: 7, kind: output, shape index: {1}]
  %8 = xla_tuple %s6, %s7
  %s9 = sld [smem:[#allocation0]]
  $region111: #{_gru_pallas.1} parent=0
    _
  %s11 = ssub.s32 1, %s9
  %s12 = scalar_select 0, %s11, %s9
  $region1: #{_gru_pallas.1} parent=0
    #allocation3 [shape = 'u8[16384]{0}', space=vmem, size = 0x4000, scoped, tag = 'input window, operand 0']
    #allocation4 [shape = 'u8[1024]{0}', space=vmem, size = 0x400, scoped, tag = 'output window, operand 1, single buffered']
    #allocation5 [shape = 's32[2]{0}', space=sflag, size = 0x8, scoped, tag = 'scoped memory for _gru_pallas.1']
    %13 = vsyncpa [#allocation5], 0
    loop: start=0, step=1, limit=4
    $region2: #{_gru_pallas.1} parent=1 // loop_pre_header
      _
    $region3: #{_gru_pallas.1} parent=1 // loop_header
      %s15 = sphi 0, %s19
      %p16 = scmp.ge.s32.totalorder %s15, 4
      %s22 = sphi 0, %s34
      %s23 = sphi 0, %s30
      %s24 = sphi 0, %s22
      %s25 = sphi 0, %s23
      %s26 = sphi 0, %s24
      %s27 = sphi 0, %s25
      %s39 = sphi 0, %s41
      %s42 = sphi 0, %s39
      %s43 = sphi 0, %s42
      %s59 = sphi 0, %s43
      %s65 = sphi 0, %s67
      %s68 = sphi 0, %s65
      %s69 = sphi 0, %s68
      %s85 = sphi 0, %s69
      %s89 = sphi 0, %s89
      %s91 = sphi 0, %s89
      %s92 = sphi 0, %s91
      %s106 = sphi 0, %s92
      %s110 = sphi 0, %s110
      %s112 = sphi 0, %s110
      %s113 = sphi 0, %s112
      %s127 = sphi 0, %s113
      %s131 = sphi 0, %s131
      %s133 = sphi 0, %s131
      %s134 = sphi 0, %s133
      %s148 = sphi 0, %s134
      %s152 = sphi 0, %s152
      %s154 = sphi 0, %s152
      %s155 = sphi 0, %s154
      %s169 = sphi 0, %s155
      %s177 = sphi 0, %s179
      %s180 = sphi 0, %s177
      %s181 = sphi 0, %s180
      %s197 = sphi 0, %s181
      %s203 = sphi 0, %s205
      %s206 = sphi 0, %s203
      %s207 = sphi 0, %s206
      %s223 = sphi 0, %s207
    $region4: #{_gru_pallas.1} parent=1 // loop_header_branch
      %18 = sbr.rel (%p16) target = $region8
    $region5: #{_gru_pallas.1} parent=1 // loop_body
      %s20 = ssub.s32 %s15, 1
      %s21 = ssub.s32 %s15, 2
      %s28 = sadd.s32 1, %s23
      %p29 = scmp.ge.s32.totalorder %s28, 2
      %s30 = scalar_select %p29, 0, %s28
      %s31 = sadd.s32 1, %s22
      %s32 = scalar_select %p29, %s31, %s22
      %p33 = scmp.ge.s32.totalorder %s32, 1
      %s34 = scalar_select %p33, 0, %s32
      %s35 = ssub.s32 %s22, %s34
      %s36 = ssub.s32 %s23, %s30
      %s37 = sor.u32 %s35, %s36
      %p38 = scmp.eq.s32.totalorder %s37, 0
      %s40 = sadd.s32 %s39, 1
      %s41 = scalar_select %p38, %s39, %s40
      %p44 = pneg %p38
      %p45 = scmp.eq.s32.totalorder %s15, 1
      %p46 = por %p44, %p45
      %p47 = scmp.ne.s32.totalorder %s39, %s42
      %p48 = scmp.eq.s32.totalorder %s15, 0
      %p49 = por %p47, %p48
      %p50 = scmp.ne.s32.totalorder %s39, %s42
      %p51 = scmp.eq.s32.totalorder %s20, 1
      %p52 = por %p50, %p51
      %p53 = scmp.ne.s32.totalorder %s42, %s43
      %p54 = scmp.eq.s32.totalorder %s20, 0
      %p55 = por %p53, %p54
      %p56 = scmp.ne.s32.totalorder %s42, %s43
      %p57 = scmp.eq.s32.totalorder %s21, 1
      %p58 = por %p56, %p57
      %p60 = scmp.ne.s32.totalorder %s43, %s59
      %p61 = scmp.eq.s32.totalorder %s21, 0
      %p62 = por %p60, %p61
      %s63 = ssub.s32 %s22, %s34
      %p64 = scmp.eq.s32.totalorder %s63, 0
      %s66 = sadd.s32 %s65, 1
      %s67 = scalar_select %p64, %s65, %s66
      %p70 = pneg %p64
      %p71 = scmp.eq.s32.totalorder %s15, 1
      %p72 = por %p70, %p71
      %p73 = scmp.ne.s32.totalorder %s65, %s68
      %p74 = scmp.eq.s32.totalorder %s15, 0
      %p75 = por %p73, %p74
      %p76 = scmp.ne.s32.totalorder %s65, %s68
      %p77 = scmp.eq.s32.totalorder %s20, 1
      %p78 = por %p76, %p77
      %p79 = scmp.ne.s32.totalorder %s68, %s69
      %p80 = scmp.eq.s32.totalorder %s20, 0
      %p81 = por %p79, %p80
      %p82 = scmp.ne.s32.totalorder %s68, %s69
      %p83 = scmp.eq.s32.totalorder %s21, 1
      %p84 = por %p82, %p83
      %p86 = scmp.ne.s32.totalorder %s69, %s85
      %p87 = scmp.eq.s32.totalorder %s21, 0
      %p88 = por %p86, %p87
      %s90 = sadd.s32 %s89, 1
      %p93 = scmp.eq.s32.totalorder %s15, 1
      %p94 = scmp.ne.s32.totalorder %s89, %s91
      %p95 = scmp.eq.s32.totalorder %s15, 0
      %p96 = por %p94, %p95
      %p97 = scmp.ne.s32.totalorder %s89, %s91
      %p98 = scmp.eq.s32.totalorder %s20, 1
      %p99 = por %p97, %p98
      %p100 = scmp.ne.s32.totalorder %s91, %s92
      %p101 = scmp.eq.s32.totalorder %s20, 0
      %p102 = por %p100, %p101
      %p103 = scmp.ne.s32.totalorder %s91, %s92
      %p104 = scmp.eq.s32.totalorder %s21, 1
      %p105 = por %p103, %p104
      %p107 = scmp.ne.s32.totalorder %s92, %s106
      %p108 = scmp.eq.s32.totalorder %s21, 0
      %p109 = por %p107, %p108
      %s111 = sadd.s32 %s110, 1
      %p114 = scmp.eq.s32.totalorder %s15, 1
      %p115 = scmp.ne.s32.totalorder %s110, %s112
      %p116 = scmp.eq.s32.totalorder %s15, 0
      %p117 = por %p115, %p116
      %p118 = scmp.ne.s32.totalorder %s110, %s112
      %p119 = scmp.eq.s32.totalorder %s20, 1
      %p120 = por %p118, %p119
      %p121 = scmp.ne.s32.totalorder %s112, %s113
      %p122 = scmp.eq.s32.totalorder %s20, 0
      %p123 = por %p121, %p122
      %p124 = scmp.ne.s32.totalorder %s112, %s113
      %p125 = scmp.eq.s32.totalorder %s21, 1
      %p126 = por %p124, %p125
      %p128 = scmp.ne.s32.totalorder %s113, %s127
      %p129 = scmp.eq.s32.totalorder %s21, 0
      %p130 = por %p128, %p129
      %s132 = sadd.s32 %s131, 1
      %p135 = scmp.eq.s32.totalorder %s15, 1
      %p136 = scmp.ne.s32.totalorder %s131, %s133
      %p137 = scmp.eq.s32.totalorder %s15, 0
      %p138 = por %p136, %p137
      %p139 = scmp.ne.s32.totalorder %s131, %s133
      %p140 = scmp.eq.s32.totalorder %s20, 1
      %p141 = por %p139, %p140
      %p142 = scmp.ne.s32.totalorder %s133, %s134
      %p143 = scmp.eq.s32.totalorder %s20, 0
      %p144 = por %p142, %p143
      %p145 = scmp.ne.s32.totalorder %s133, %s134
      %p146 = scmp.eq.s32.totalorder %s21, 1
      %p147 = por %p145, %p146
      %p149 = scmp.ne.s32.totalorder %s134, %s148
      %p150 = scmp.eq.s32.totalorder %s21, 0
      %p151 = por %p149, %p150
      %s153 = sadd.s32 %s152, 1
      %p156 = scmp.eq.s32.totalorder %s15, 1
      %p157 = scmp.ne.s32.totalorder %s152, %s154
      %p158 = scmp.eq.s32.totalorder %s15, 0
      %p159 = por %p157, %p158
      %p160 = scmp.ne.s32.totalorder %s152, %s154
      %p161 = scmp.eq.s32.totalorder %s20, 1
      %p162 = por %p160, %p161
      %p163 = scmp.ne.s32.totalorder %s154, %s155
      %p164 = scmp.eq.s32.totalorder %s20, 0
      %p165 = por %p163, %p164
      %p166 = scmp.ne.s32.totalorder %s154, %s155
      %p167 = scmp.eq.s32.totalorder %s21, 1
      %p168 = por %p166, %p167
      %p170 = scmp.ne.s32.totalorder %s155, %s169
      %p171 = scmp.eq.s32.totalorder %s21, 0
      %p172 = por %p170, %p171
      %s173 = ssub.s32 %s23, %s30
      %s174 = ssub.s32 %s22, %s34
      %s175 = sor.u32 %s173, %s174
      %p176 = scmp.eq.s32.totalorder %s175, 0
      %s178 = sadd.s32 %s177, 1
      %s179 = scalar_select %p176, %s177, %s178
      %p182 = pneg %p176
      %p183 = scmp.eq.s32.totalorder %s15, 1
      %p184 = por %p182, %p183
      %p185 = scmp.ne.s32.totalorder %s177, %s180
      %p186 = scmp.eq.s32.totalorder %s15, 0
      %p187 = por %p185, %p186
      %p188 = scmp.ne.s32.totalorder %s177, %s180
      %p189 = scmp.eq.s32.totalorder %s20, 1
      %p190 = por %p188, %p189
      %p191 = scmp.ne.s32.totalorder %s180, %s181
      %p192 = scmp.eq.s32.totalorder %s20, 0
      %p193 = por %p191, %p192
      %p194 = scmp.ne.s32.totalorder %s180, %s181
      %p195 = scmp.eq.s32.totalorder %s21, 1
      %p196 = por %p194, %p195
      %p198 = scmp.ne.s32.totalorder %s181, %s197
      %p199 = scmp.eq.s32.totalorder %s21, 0
      %p200 = por %p198, %p199
      %s201 = ssub.s32 %s22, %s34
      %p202 = scmp.eq.s32.totalorder %s201, 0
      %s204 = sadd.s32 %s203, 1
      %s205 = scalar_select %p202, %s203, %s204
      %p208 = pneg %p202
      %p209 = scmp.eq.s32.totalorder %s15, 1
      %p210 = por %p208, %p209
      %p211 = scmp.ne.s32.totalorder %s203, %s206
      %p212 = scmp.eq.s32.totalorder %s15, 0
      %p213 = por %p211, %p212
      %p214 = scmp.ne.s32.totalorder %s203, %s206
      %p215 = scmp.eq.s32.totalorder %s20, 1
      %p216 = por %p214, %p215
      %p217 = scmp.ne.s32.totalorder %s206, %s207
      %p218 = scmp.eq.s32.totalorder %s20, 0
      %p219 = por %p217, %p218
      %p220 = scmp.ne.s32.totalorder %s206, %s207
      %p221 = scmp.eq.s32.totalorder %s21, 1
      %p222 = por %p220, %p221
      %p224 = scmp.ne.s32.totalorder %s207, %s223
      %p225 = scmp.eq.s32.totalorder %s21, 0
      %p226 = por %p224, %p225
      %p227 = scmp.le.s32.totalorder 1, %s15
      %p228 = scmp.lt.s32.totalorder %s15, 3
      %p229 = pnand %p227, %p228
      %p230 = pneg %p229
      // Predicated region
      $region9: #{_gru_pallas.1} parent=5 // pred_check
        _
      $region10: #{_gru_pallas.1} parent=5 // pred_check_branch
        %232 = sbr.rel (%p229) target = $region12
      $region11: #{_gru_pallas.1} parent=5 // pred_region
        %s233 = ssub.s32 %s15, 1
        // Predicated region
        $region13: #{_gru_pallas.1} parent=11 // pred_check
          %p234 = pneg %p81
        $region14: #{_gru_pallas.1} parent=11 // pred_check_branch
          %236 = sbr.rel (%p234) target = $region16
        $region15: #{_gru_pallas.1} parent=11 // pred_region
          %p237 = scmp.lt.s32.totalorder %s24, 0
          %s238 = scalar_select %p237, %s24, 0
          %s239 = smul.addr %s238, 2
          %s240 = scalar_lea.vmem %s1, %s239
        $region16: #{_gru_pallas.1} parent=11 // pred_fallthru
          _
        // Predicated region
        $region17: #{_gru_pallas.1} parent=11 // pred_check
          %p241 = pneg %p102
        $region18: #{_gru_pallas.1} parent=11 // pred_check_branch
          %243 = sbr.rel (%p241) target = $region20
        $region19: #{_gru_pallas.1} parent=11 // pred_region
          _
        $region20: #{_gru_pallas.1} parent=11 // pred_fallthru
          _
        // Predicated region
        $region21: #{_gru_pallas.1} parent=11 // pred_check
          %p244 = pneg %p123
        $region22: #{_gru_pallas.1} parent=11 // pred_check_branch
          %246 = sbr.rel (%p244) target = $region24
        $region23: #{_gru_pallas.1} parent=11 // pred_region
          _
        $region24: #{_gru_pallas.1} parent=11 // pred_fallthru
          _
        // Predicated region
        $region25: #{_gru_pallas.1} parent=11 // pred_check
          %p247 = pneg %p144
        $region26: #{_gru_pallas.1} parent=11 // pred_check_branch
          %249 = sbr.rel (%p247) target = $region28
        $region27: #{_gru_pallas.1} parent=11 // pred_region
          _
        $region28: #{_gru_pallas.1} parent=11 // pred_fallthru
          _
        // Predicated region
        $region29: #{_gru_pallas.1} parent=11 // pred_check
          %p250 = pneg %p165
        $region30: #{_gru_pallas.1} parent=11 // pred_check_branch
          %252 = sbr.rel (%p250) target = $region32
        $region31: #{_gru_pallas.1} parent=11 // pred_region
          _
        $region32: #{_gru_pallas.1} parent=11 // pred_fallthru
          _
      $region12: #{_gru_pallas.1} parent=5 // pred_fallthru
        _
      %p253 = scmp.lt.s32.totalorder %s15, 2
      // Predicated region
      $region33: #{_gru_pallas.1} parent=5 // pred_check
        %p254 = pneg %p253
      $region34: #{_gru_pallas.1} parent=5 // pred_check_branch
        %256 = sbr.rel (%p254) target = $region36
      $region35: #{_gru_pallas.1} parent=5 // pred_region
        // Predicated region
        $region37: #{_gru_pallas.1} parent=35 // pred_check
          %p257 = pneg %p49
        $region38: #{_gru_pallas.1} parent=35 // pred_check_branch
          %259 = sbr.rel (%p257) target = $region40
        $region39: #{_gru_pallas.1} parent=35 // pred_region
          %s260 = sand.u32 %s39, 1
          %s261 = sand.u32 %s39, 1
          %s262 = smul.addr %s261, 16
          %s263 = scalar_lea.vmem [#allocation3], %s262
          %s264 = smul.u32 2, %s22
          %s265 = smul.addr %s264, 2
          %s266 = sadd.s32 %s23, %s265
          %s267 = smul.addr %s266, 8
          %s268 = scalar_lea.vmem %s0, %s267
          // Predicated region
          $region41: #{_gru_pallas.1} parent=39 // pred_check
            _
          $region42: #{_gru_pallas.1} parent=39 // pred_check_branch
            %270 = sbr.rel (0) target = $region44
          $region43: #{_gru_pallas.1} parent=39 // pred_region
            // Predicated region
            $region45: #{_gru_pallas.1} parent=43 // pred_check
              _
            $region46: #{_gru_pallas.1} parent=43 // pred_check_branch
              %272 = sbr.rel (0) target = $region48
            $region47: #{_gru_pallas.1} parent=43 // pred_region
              // Predicated region
              $region60: #{_gru_pallas.1} parent=47 // pred_check
                _
              $region61: #{_gru_pallas.1} parent=47 // pred_check_branch
                %289 = sbr.rel (0) target = $region63
              $region62: #{_gru_pallas.1} parent=47 // pred_region
                loop: start=0, step=1, limit=1
                $region64: #{_gru_pallas.1} parent=62 // loop_pre_header
                  _
                $region65: #{_gru_pallas.1} parent=62 // loop_header
                  %s291 = sphi 0, %s295
                  %p292 = scmp.ge.s32.totalorder %s291, 1
                  %s296 = sphi %s268, %s268
                  %s297 = sphi %s263, %s263
                $region66: #{_gru_pallas.1} parent=62 // loop_header_branch
                  %294 = sbr.rel (%p292) target = $region70
                $region67: #{_gru_pallas.1} parent=62 // loop_body
                  %v298 = vld [vmem:[%s296] sm:$0xff]
                  %299 = vst [vmem:[%s297] sm:$0xff] %v298
                  %v300 = vld [vmem:[%s296 + $0x10] sm:$0xff]
                  %301 = vst [vmem:[%s297 + $0x8] sm:$0xff] %v300
                $region68: #{_gru_pallas.1} parent=62 // loop_footer
                  %s295 = sadd.s32 1, %s291
                $region69: #{_gru_pallas.1} parent=62 // loop_footer_branch
                  %290 = sbr.rel target = $region65
                $region70: #{_gru_pallas.1} parent=62 // loop_exit
                  _
              $region63: #{_gru_pallas.1} parent=47 // pred_fallthru
                _
              // Predicated region
              $region71: #{_gru_pallas.1} parent=47 // pred_check
                _
              $region72: #{_gru_pallas.1} parent=47 // pred_check_branch
                %303 = sbr.rel target = $region74
              $region73: #{_gru_pallas.1} parent=47 // pred_region
                _
              $region74: #{_gru_pallas.1} parent=47 // pred_fallthru
                _
            $region48: #{_gru_pallas.1} parent=43 // pred_fallthru
              _
            // Predicated region
            $region49: #{_gru_pallas.1} parent=43 // pred_check
              _
            $region50: #{_gru_pallas.1} parent=43 // pred_check_branch
              %274 = sbr.rel target = $region52
            $region51: #{_gru_pallas.1} parent=43 // pred_region
              loop: start=0, step=1, limit=1
              $region53: #{_gru_pallas.1} parent=51 // loop_pre_header
                _
              $region54: #{_gru_pallas.1} parent=51 // loop_header
                %s277 = sphi 0, %s281
                %p278 = scmp.ge.s32.totalorder %s277, 1
                %s282 = sphi %s268, %s268
                %s283 = sphi %s263, %s263
              $region55: #{_gru_pallas.1} parent=51 // loop_header_branch
                %280 = sbr.rel (%p278) target = $region59
              $region56: #{_gru_pallas.1} parent=51 // loop_body
                %v284 = vld [vmem:[%s282] sm:$0xff]
                %285 = vst [vmem:[%s283] sm:$0xff] %v284
                %v286 = vld [vmem:[%s282 + $0x10] sm:$0xff]
                %287 = vst [vmem:[%s283 + $0x8] sm:$0xff] %v286
              $region57: #{_gru_pallas.1} parent=51 // loop_footer
                %s281 = sadd.s32 1, %s277
              $region58: #{_gru_pallas.1} parent=51 // loop_footer_branch
                %276 = sbr.rel target = $region54
              $region59: #{_gru_pallas.1} parent=51 // loop_exit
                _
            $region52: #{_gru_pallas.1} parent=43 // pred_fallthru
              _
          $region44: #{_gru_pallas.1} parent=39 // pred_fallthru
            _
          %304 = vnop
        $region40: #{_gru_pallas.1} parent=35 // pred_fallthru
          _
      $region36: #{_gru_pallas.1} parent=5 // pred_fallthru
        _
      %p305 = scmp.le.s32.totalorder 1, %s15
      %p306 = scmp.lt.s32.totalorder %s15, 3
      %p307 = pnand %p305, %p306
      %p308 = pneg %p307
      // Predicated region
      $region75: #{_gru_pallas.1} parent=5 // pred_check
        _
      $region76: #{_gru_pallas.1} parent=5 // pred_check_branch
        %310 = sbr.rel (%p307) target = $region78
      $region77: #{_gru_pallas.1} parent=5 // pred_region
        %s311 = ssub.s32 %s15, 1
        %s312 = sand.u32 %s42, 1
        %s313 = sand.u32 %s42, 1
        %s314 = smul.addr %s313, 16
        %s315 = scalar_lea.vmem [#allocation3], %s314
        // Predicated region
        $region79: #{_gru_pallas.1} parent=77 // pred_check
          %p316 = pneg %p55
        $region80: #{_gru_pallas.1} parent=77 // pred_check_branch
          %318 = sbr.rel (%p316) target = $region82
        $region81: #{_gru_pallas.1} parent=77 // pred_region
          _
        $region82: #{_gru_pallas.1} parent=77 // pred_fallthru
          _
        %s319 = sand.u32 %s42, 1
        %s320 = sand.u32 %s42, 1
        %s321 = smul.addr %s320, 16
        %s322 = scalar_lea.vmem [#allocation3], %s321
        %p323 = pneg %p55
        %p324 = pneg %p52
        %p325 = scmp.lt.s32.totalorder %s24, 0
        %s326 = scalar_select %p325, %s24, 0
        %s327 = smul.addr %s326, 2
        %s328 = scalar_lea.vmem %s1, %s327
        %p329 = pneg %p81
        %p330 = pneg %p78
        %p331 = pneg %p102
        %p332 = pneg %p99
        %p333 = pneg %p123
        %p334 = pneg %p120
        %p335 = pneg %p144
        %p336 = pneg %p141
        %p337 = pneg %p165
        %p338 = pneg %p162
        %p339 = pneg %p193
        %p340 = pneg %p190
        %p341 = scmp.lt.s32.totalorder %s25, 1
        %s342 = scalar_select %p341, %s25, 1
        %p343 = scmp.lt.s32.totalorder %s24, 0
        %s344 = scalar_select %p343, %s24, 0
        %s345 = smul.addr %s344, 2
        %s346 = smul.addr %s342, 2
        %s347 = sadd.s32 %s345, %s346
        %s348 = smul.addr %s347, 2
        %s349 = scalar_lea.vmem %s6, %s348
        %p350 = pneg %p219
        %p351 = pneg %p216
        %s352 = smul.u32 2, %s24
        %p353 = scmp.lt.s32.totalorder %s24, 0
        %s354 = scalar_select %p353, %s24, 0
        %s355 = smul.addr %s354, 2
        %s356 = scalar_lea.vmem %s1, %s355
        %p357 = scmp.lt.s32.totalorder %s25, 1
        %s358 = scalar_select %p357, %s25, 1
        %p359 = scmp.lt.s32.totalorder %s24, 0
        %s360 = scalar_select %p359, %s24, 0
        %s361 = smul.addr %s360, 2
        %s362 = smul.addr %s358, 2
        %s363 = sadd.s32 %s361, %s362
        %s364 = smul.addr %s363, 2
        %s365 = scalar_lea.vmem %s6, %s364
        %p366 = scmp.eq.s32.totalorder %s25, 0
        // Predicated region
        $region83: #{_gru_pallas.1} parent=77 // pred_check
          %p367 = pneg %p366
        $region84: #{_gru_pallas.1} parent=77 // pred_check_branch
          %369 = sbr.rel (%p367) target = $region86
        $region85: #{_gru_pallas.1} parent=77 // pred_region
          %v370 = vld [vmem:[%s356] sm:$0x3]
          %vm371 = vcmask 254976
          %372 = vst.msk [vmem:[#allocation2] sm:$0x3] %vm371, %v370
        $region86: #{_gru_pallas.1} parent=77 // pred_fallthru
          _
        %v373 = vld [vmem:[%s315] sm:$0xff]
        %v374 = vld [vmem:[%s315 + $0x8] sm:$0xff]
        %v375 = vld [vmem:[%s2] sm:$0xff]
        %v376 = vld [vmem:[%s2 + $0x8] sm:$0xff]
        %v377 = vld [vmem:[%s2 + $0x10] sm:$0xff]
        %v378 = vld [vmem:[%s2 + $0x18] sm:$0xff]
        %v379 = vld [vmem:[%s2 + $0x20] sm:$0xff]
        %v380 = vld [vmem:[%s2 + $0x28] sm:$0xff]
        %v381 = vld [vmem:[%s2 + $0x30] sm:$0xff]
        %v382 = vld [vmem:[%s2 + $0x38] sm:$0xff]
        %v383 = vld [vmem:[%s2 + $0x40] sm:$0xff]
        %v384 = vld [vmem:[%s2 + $0x48] sm:$0xff]
        %v385 = vld [vmem:[%s2 + $0x50] sm:$0xff]
        %v386 = vld [vmem:[%s2 + $0x58] sm:$0xff]
        %v387 = vld [vmem:[%s2 + $0x60] sm:$0xff]
        %v388 = vld [vmem:[%s2 + $0x68] sm:$0xff]
        %v389 = vld [vmem:[%s2 + $0x70] sm:$0xff]
        %v390 = vld [vmem:[%s2 + $0x78] sm:$0xff]
        %v391 = vld [vmem:[%s4] sm:$0x1]
        %v393 = vlaneseq
        %v394 = vshrl.u32 %v393, 7
        %v395 = vsub.s32 0, %v394
        %v396 = vrot.slane %v391, %v395
        %398 = vmatprep.subr.mxu0 0.0
        %399 = vmatpush1.msra.mxu0 %v375
        %400 = vmatprep.subr.mxu0 0.0
        %401 = vmatpush1.msra.mxu0 %v376
        %402 = vmatprep.subr.mxu0 0.0
        %403 = vmatpush1.msra.mxu0 %v377
        %404 = vmatprep.subr.mxu0 0.0
        %405 = vmatpush1.msra.mxu0 %v378
        %406 = vmatprep.subr.mxu0 0.0
        %407 = vmatpush1.msra.mxu0 %v379
        %408 = vmatprep.subr.mxu0 0.0
        %409 = vmatpush1.msra.mxu0 %v380
        %410 = vmatprep.subr.mxu0 0.0
        %411 = vmatpush1.msra.mxu0 %v381
        %412 = vmatprep.subr.mxu0 0.0
        %413 = vmatpush1.msra.mxu0 %v382
        %414 = vmatprep.subr.mxu0 0.0
        %415 = vmatpush1.msra.mxu0 %v383
        %416 = vmatprep.subr.mxu0 0.0
        %417 = vmatpush1.msra.mxu0 %v384
        %418 = vmatprep.subr.mxu0 0.0
        %419 = vmatpush1.msra.mxu0 %v385
        %420 = vmatprep.subr.mxu0 0.0
        %421 = vmatpush1.msra.mxu0 %v386
        %422 = vmatprep.subr.mxu0 0.0
        %423 = vmatpush1.msra.mxu0 %v387
        %424 = vmatprep.subr.mxu0 0.0
        %425 = vmatpush1.msra.mxu0 %v388
        %426 = vmatprep.subr.mxu0 0.0
        %427 = vmatpush1.msra.mxu0 %v389
        %428 = vmatprep.subr.mxu0 0.0
        %429 = vmatpush1.msra.mxu0 %v390
        %430 = vmatprep.subr.mxu0 0.0
        %431 = vmatpush1.msra.mxu0 0.0
        %432 = vmatprep.subr.mxu0 0.0
        %433 = vmatpush1.msra.mxu0 0.0
        %434 = vmatprep.subr.mxu0 0.0
        %435 = vmatpush1.msra.mxu0 0.0
        %436 = vmatprep.subr.mxu0 0.0
        %437 = vmatpush1.msra.mxu0 0.0
        %438 = vmatprep.subr.mxu0 0.0
        %439 = vmatpush1.msra.mxu0 0.0
        %440 = vmatprep.subr.mxu0 0.0
        %441 = vmatpush1.msra.mxu0 0.0
        %442 = vmatprep.subr.mxu0 0.0
        %443 = vmatpush1.msra.mxu0 0.0
        %444 = vmatprep.subr.mxu0 0.0
        %445 = vmatpush1.msra.mxu0 0.0
        %446 = vmatprep.subr.mxu0 0.0
        %447 = vmatpush1.msra.mxu0 0.0
        %448 = vmatprep.subr.mxu0 0.0
        %449 = vmatpush1.msra.mxu0 0.0
        %450 = vmatprep.subr.mxu0 0.0
        %451 = vmatpush1.msra.mxu0 0.0
        %452 = vmatprep.subr.mxu0 0.0
        %453 = vmatpush1.msra.mxu0 0.0
        %454 = vmatprep.subr.mxu0 0.0
        %455 = vmatpush1.msra.mxu0 0.0
        %456 = vmatprep.subr.mxu0 0.0
        %457 = vmatpush1.msra.mxu0 0.0
        %458 = vmatprep.subr.mxu0 0.0
        %459 = vmatpush1.msra.mxu0 0.0
        %460 = vmatprep.subr.mxu0 0.0
        %461 = vmatpush1.msra.mxu0 0.0
        %462 = vmatprep.mubr.f32.mxu0 0.0
        %463 = vmatmul.mubr.f32.gmra.mrb[0].mxu0 %v373
        %v464 = vpop.f32.mrb[0].mxu0
        %v465 = vadd.f32 %v396, %v464
        %v466 = vpop.f32.mrb[0].mxu0
        %467 = vmatprep.mubr.f32.mxu0 0.0
        %468 = vmatmul.mubr.f32.gmra.mrb[0].mxu0 %v374
        %v469 = vpop.f32.mrb[0].mxu0
        %v470 = vadd.f32 %v396, %v469
        %v471 = vpop.f32.mrb[0].mxu0
        %472 = vdwg.mxu0
        %v473 = vld [vmem:[%s3] sm:$0xff]
        %v474 = vld [vmem:[%s3 + $0x8] sm:$0xff]
        %v475 = vld [vmem:[%s3 + $0x10] sm:$0xff]
        %v476 = vld [vmem:[%s3 + $0x18] sm:$0xff]
        %v477 = vld [vmem:[%s5] sm:$0x1]
        %v479 = vlaneseq
        %v480 = vshrl.u32 %v479, 7
        %v481 = vsub.s32 0, %v480
        %v482 = vrot.slane %v477, %v481
        %v483 = vld [vmem:[#allocation2] sm:$0x3]
        %vm484 = vcmask 261120
        %v486 = vsel %vm484, %v483, 0
        %488 = vmatprep.subr.mxu0 0.0
        %489 = vmatpush1.msra.mxu0 %v473
        %490 = vmatprep.subr.mxu0 0.0
        %491 = vmatpush1.msra.mxu0 %v474
        %492 = vmatprep.subr.mxu0 0.0
        %493 = vmatpush1.msra.mxu0 %v475
        %494 = vmatprep.subr.mxu0 0.0
        %495 = vmatpush1.msra.mxu0 %v476
        %496 = vmatprep.subr.mxu0 0.0
        %497 = vmatpush1.msra.mxu0 0.0
        %498 = vmatprep.subr.mxu0 0.0
        %499 = vmatpush1.msra.mxu0 0.0
        %500 = vmatprep.subr.mxu0 0.0
        %501 = vmatpush1.msra.mxu0 0.0
        %502 = vmatprep.subr.mxu0 0.0
        %503 = vmatpush1.msra.mxu0 0.0
        %504 = vmatprep.subr.mxu0 0.0
        %505 = vmatpush1.msra.mxu0 0.0
        %506 = vmatprep.subr.mxu0 0.0
        %507 = vmatpush1.msra.mxu0 0.0
        %508 = vmatprep.subr.mxu0 0.0
        %509 = vmatpush1.msra.mxu0 0.0
        %510 = vmatprep.subr.mxu0 0.0
        %511 = vmatpush1.msra.mxu0 0.0
        %512 = vmatprep.subr.mxu0 0.0
        %513 = vmatpush1.msra.mxu0 0.0
        %514 = vmatprep.subr.mxu0 0.0
        %515 = vmatpush1.msra.mxu0 0.0
        %516 = vmatprep.subr.mxu0 0.0
        %517 = vmatpush1.msra.mxu0 0.0
        %518 = vmatprep.subr.mxu0 0.0
        %519 = vmatpush1.msra.mxu0 0.0
        %520 = vmatprep.subr.mxu0 0.0
        %521 = vmatpush1.msra.mxu0 0.0
        %522 = vmatprep.subr.mxu0 0.0
        %523 = vmatpush1.msra.mxu0 0.0
        %524 = vmatprep.subr.mxu0 0.0
        %525 = vmatpush1.msra.mxu0 0.0
        %526 = vmatprep.subr.mxu0 0.0
        %527 = vmatpush1.msra.mxu0 0.0
        %528 = vmatprep.subr.mxu0 0.0
        %529 = vmatpush1.msra.mxu0 0.0
        %530 = vmatprep.subr.mxu0 0.0
        %531 = vmatpush1.msra.mxu0 0.0
        %532 = vmatprep.subr.mxu0 0.0
        %533 = vmatpush1.msra.mxu0 0.0
        %534 = vmatprep.subr.mxu0 0.0
        %535 = vmatpush1.msra.mxu0 0.0
        %536 = vmatprep.subr.mxu0 0.0
        %537 = vmatpush1.msra.mxu0 0.0
        %538 = vmatprep.subr.mxu0 0.0
        %539 = vmatpush1.msra.mxu0 0.0
        %540 = vmatprep.subr.mxu0 0.0
        %541 = vmatpush1.msra.mxu0 0.0
        %542 = vmatprep.subr.mxu0 0.0
        %543 = vmatpush1.msra.mxu0 0.0
        %544 = vmatprep.subr.mxu0 0.0
        %545 = vmatpush1.msra.mxu0 0.0
        %546 = vmatprep.subr.mxu0 0.0
        %547 = vmatpush1.msra.mxu0 0.0
        %548 = vmatprep.subr.mxu0 0.0
        %549 = vmatpush1.msra.mxu0 0.0
        %550 = vmatprep.subr.mxu0 0.0
        %551 = vmatpush1.msra.mxu0 0.0
        %552 = vmatprep.mubr.f32.mxu0 0.0
        %553 = vmatmul.mubr.f32.gmra.mrb[0].mxu0 %v486
        %v554 = vpop.f32.mrb[0].mxu0
        %v555 = vadd.f32 0.0, %v554
        %v556 = vpop.f32.mrb[0].mxu0
        %557 = vdwg.mxu0
        %v559 = vrot.slane %v555, 1
        %v562 = vadd.f32 %v465, %v555
        %v563 = vadd.f32 %v470, %v559
        %v564 = vxor.u32 %v562, 2147483648
        %v565 = vxor.u32 %v563, 2147483648
        %v566 = vmul.f32 %v564, 1.442695
        %v567 = vpow.pop %v566
        %v568 = vmul.f32 %v565, 1.442695
        %v569 = vpow.pop %v568
        %v570 = vadd.f32 %v567, 1.0
        %v571 = vadd.f32 %v569, 1.0
        %v572 = vrcp.pop %v570
        %v573 = vmul.f32 1.0, %v572
        %v574 = vrcp.pop %v571
        %v575 = vmul.f32 1.0, %v574
        %576 = vrot.lane.b32.xlu0 %v482, 64
        %v577 = vpop.permute.xlu0 %576
        %v579 = vadd.f32 %v555, %v577
        %v581 = vrot.slane %v579, 1
        %582 = vrot.lane.b32.xlu0 %v579, 64
        %v583 = vpop.permute.xlu0 %582
        %584 = vrot.lane.b32.xlu0 %v581, 64
        %v585 = vpop.permute.xlu0 %584
        %v588 = vmul.f32 %v573, %v583
        %v589 = vmul.f32 %v575, %v585
        %592 = vrot.lane.b32.xlu0 %v588, 64
        %v593 = vpop.permute.xlu0 %592
        %594 = vrot.lane.b32.xlu0 %v589, 64
        %v595 = vpop.permute.xlu0 %594
        %v598 = vadd.f32 %v465, %v593
        %v599 = vadd.f32 %v470, %v595
        %v600 = vtanh.pop %v598
        %v601 = vtanh.pop %v599
        %v602 = vsub.f32 1.0, %v573
        %v603 = vsub.f32 1.0, %v575
        %606 = vrot.lane.b32.xlu0 %v600, 96
        %v607 = vpop.permute.xlu0 %606
        %608 = vrot.lane.b32.xlu0 %v601, 96
        %v609 = vpop.permute.xlu0 %608
        %v612 = vmul.f32 %v602, %v607
        %v613 = vmul.f32 %v603, %v609
        %v614 = vrot.slane %v483, 1
        %615 = vrot.lane.b32.xlu0 %v483, 32
        %v616 = vpop.permute.xlu0 %615
        %617 = vrot.lane.b32.xlu0 %v614, 32
        %v618 = vpop.permute.xlu0 %617
        %v621 = vmul.f32 %v573, %v616
        %v622 = vmul.f32 %v575, %v618
        %v623 = vadd.f32 %v612, %v621
        %v624 = vadd.f32 %v613, %v622
        %v628 = vunpack.c.l.s4 1983009808
        %v629 = vunpack.c.0.s8 %v628
        %v630 = vlaneseq
        %v631 = vshrl.u32 %v630, 7
        %v632 = vsub.s32 %v629, %v631
        %v633 = vrot.slane %v623, %v632
        %v635 = vunpack.c.l.s4 1983009808
        %v636 = vunpack.c.0.s8 %v635
        %v637 = vlaneseq
        %v638 = vshrl.u32 %v637, 7
        %v639 = vsub.s32 %v636, %v638
        %v640 = vrot.slane %v624, %v639
        %vm641 = vcmask 1044484
        %v642 = vsel %vm641, %v633, %v633
        %vm643 = vcmask 1046534
        %v644 = vsel %vm643, %v633, %v642
        %v645 = vrot.slane %v640, 7
        %vm646 = vcmask 1041409
        %v647 = vsel %vm646, %v645, %v644
        %vm648 = vcmask 1043459
        %v649 = vsel %vm648, %v645, %v647
        %vm650 = vcmask 1045509
        %v651 = vsel %vm650, %v645, %v649
        %vm652 = vcmask 1047559
        %v653 = vsel %vm652, %v645, %v651
        %654 = vrot.lane.b32.xlu0 %v653, 96
        %v655 = vpop.permute.xlu0 %654
        %vm657 = vcmask 254976
        %658 = vst.msk [vmem:[%s365] sm:$0x3] %vm657, %v655
        %v659 = vrot.slane %v624, 7
        %v660 = vsel %vm646, %v659, %v623
        %661 = vrot.lane.b32.xlu0 %v660, 96
        %v662 = vpop.permute.xlu0 %661
        %v663 = vsel %vm484, %v662, 0
        %665 = vmatprep.subr.mxu0 0.0
        %666 = vmatpush1.msra.mxu0 %v473
        %667 = vmatprep.subr.mxu0 0.0
        %668 = vmatpush1.msra.mxu0 %v474
        %669 = vmatprep.subr.mxu0 0.0
        %670 = vmatpush1.msra.mxu0 %v475
        %671 = vmatprep.subr.mxu0 0.0
        %672 = vmatpush1.msra.mxu0 %v476
        %673 = vmatprep.subr.mxu0 0.0
        %674 = vmatpush1.msra.mxu0 0.0
        %675 = vmatprep.subr.mxu0 0.0
        %676 = vmatpush1.msra.mxu0 0.0
        %677 = vmatprep.subr.mxu0 0.0
        %678 = vmatpush1.msra.mxu0 0.0
        %679 = vmatprep.subr.mxu0 0.0
        %680 = vmatpush1.msra.mxu0 0.0
        %681 = vmatprep.subr.mxu0 0.0
        %682 = vmatpush1.msra.mxu0 0.0
        %683 = vmatprep.subr.mxu0 0.0
        %684 = vmatpush1.msra.mxu0 0.0
        %685 = vmatprep.subr.mxu0 0.0
        %686 = vmatpush1.msra.mxu0 0.0
        %687 = vmatprep.subr.mxu0 0.0
        %688 = vmatpush1.msra.mxu0 0.0
        %689 = vmatprep.subr.mxu0 0.0
        %690 = vmatpush1.msra.mxu0 0.0
        %691 = vmatprep.subr.mxu0 0.0
        %692 = vmatpush1.msra.mxu0 0.0
        %693 = vmatprep.subr.mxu0 0.0
        %694 = vmatpush1.msra.mxu0 0.0
        %695 = vmatprep.subr.mxu0 0.0
        %696 = vmatpush1.msra.mxu0 0.0
        %697 = vmatprep.subr.mxu0 0.0
        %698 = vmatpush1.msra.mxu0 0.0
        %699 = vmatprep.subr.mxu0 0.0
        %700 = vmatpush1.msra.mxu0 0.0
        %701 = vmatprep.subr.mxu0 0.0
        %702 = vmatpush1.msra.mxu0 0.0
        %703 = vmatprep.subr.mxu0 0.0
        %704 = vmatpush1.msra.mxu0 0.0
        %705 = vmatprep.subr.mxu0 0.0
        %706 = vmatpush1.msra.mxu0 0.0
        %707 = vmatprep.subr.mxu0 0.0
        %708 = vmatpush1.msra.mxu0 0.0
        %709 = vmatprep.subr.mxu0 0.0
        %710 = vmatpush1.msra.mxu0 0.0
        %711 = vmatprep.subr.mxu0 0.0
        %712 = vmatpush1.msra.mxu0 0.0
        %713 = vmatprep.subr.mxu0 0.0
        %714 = vmatpush1.msra.mxu0 0.0
        %715 = vmatprep.subr.mxu0 0.0
        %716 = vmatpush1.msra.mxu0 0.0
        %717 = vmatprep.subr.mxu0 0.0
        %718 = vmatpush1.msra.mxu0 0.0
        %719 = vmatprep.subr.mxu0 0.0
        %720 = vmatpush1.msra.mxu0 0.0
        %721 = vmatprep.subr.mxu0 0.0
        %722 = vmatpush1.msra.mxu0 0.0
        %723 = vmatprep.subr.mxu0 0.0
        %724 = vmatpush1.msra.mxu0 0.0
        %725 = vmatprep.subr.mxu0 0.0
        %726 = vmatpush1.msra.mxu0 0.0
        %727 = vmatprep.subr.mxu0 0.0
        %728 = vmatpush1.msra.mxu0 0.0
        %729 = vmatprep.mubr.f32.mxu0 0.0
        %730 = vmatmul.mubr.f32.gmra.mrb[0].mxu0 %v663
        %v731 = vpop.f32.mrb[0].mxu0
        %v732 = vadd.f32 0.0, %v731
        %v733 = vpop.f32.mrb[0].mxu0
        %734 = vdwg.mxu0
        %v736 = vrot.slane %v732, 7
        %v739 = vadd.f32 %v465, %v736
        %v740 = vadd.f32 %v470, %v732
        %v741 = vxor.u32 %v739, 2147483648
        %v742 = vxor.u32 %v740, 2147483648
        %v743 = vmul.f32 %v741, 1.442695
        %v744 = vpow.pop %v743
        %v745 = vmul.f32 %v742, 1.442695
        %v746 = vpow.pop %v745
        %v747 = vadd.f32 %v744, 1.0
        %v748 = vadd.f32 %v746, 1.0
        %v749 = vrcp.pop %v747
        %v750 = vmul.f32 1.0, %v749
        %v751 = vrcp.pop %v748
        %v752 = vmul.f32 1.0, %v751
        %v753 = vadd.f32 %v732, %v577
        %v755 = vrot.slane %v753, 7
        %756 = vrot.lane.b32.xlu0 %v755, 64
        %v757 = vpop.permute.xlu0 %756
        %758 = vrot.lane.b32.xlu0 %v753, 64
        %v759 = vpop.permute.xlu0 %758
        %v762 = vmul.f32 %v750, %v757
        %v763 = vmul.f32 %v752, %v759
        %766 = vrot.lane.b32.xlu0 %v762, 64
        %v767 = vpop.permute.xlu0 %766
        %768 = vrot.lane.b32.xlu0 %v763, 64
        %v769 = vpop.permute.xlu0 %768
        %v772 = vadd.f32 %v465, %v767
        %v773 = vadd.f32 %v470, %v769
        %v774 = vtanh.pop %v772
        %v775 = vtanh.pop %v773
        %v776 = vsub.f32 1.0, %v750
        %v777 = vsub.f32 1.0, %v752
        %780 = vrot.lane.b32.xlu0 %v774, 96
        %v781 = vpop.permute.xlu0 %780
        %782 = vrot.lane.b32.xlu0 %v775, 96
        %v783 = vpop.permute.xlu0 %782
        %v786 = vmul.f32 %v776, %v781
        %v787 = vmul.f32 %v777, %v783
        %v788 = vrot.slane %v623, 7
        %v791 = vmul.f32 %v750, %v788
        %v792 = vmul.f32 %v752, %v659
        %v793 = vadd.f32 %v786, %v791
        %v794 = vadd.f32 %v787, %v792
        %v798 = vunpack.c.l.s4 1983009808
        %v799 = vunpack.c.0.s8 %v798
        %v800 = vlaneseq
        %v801 = vshrl.u32 %v800, 7
        %v802 = vsub.s32 %v799, %v801
        %v803 = vrot.slane %v793, %v802
        %v805 = vunpack.c.l.s4 1983009808
        %v806 = vunpack.c.0.s8 %v805
        %v807 = vlaneseq
        %v808 = vshrl.u32 %v807, 7
        %v809 = vsub.s32 %v806, %v808
        %v810 = vrot.slane %v794, %v809
        %v811 = vrot.slane %v803, 1
        %v812 = vsel %vm641, %v811, %v811
        %v813 = vsel %vm643, %v811, %v812
        %v814 = vsel %vm646, %v810, %v813
        %v815 = vsel %vm648, %v810, %v814
        %v816 = vsel %vm650, %v810, %v815
        %v817 = vsel %vm652, %v810, %v816
        %vm819 = vcmask 517376
        %820 = vst.msk [vmem:[%s365] sm:$0x3] %vm819, %v817
        %v821 = vrot.slane %v793, 1
        %v822 = vsel %vm646, %v794, %v821
        %823 = vrot.lane.b32.xlu0 %v822, 96
        %v824 = vpop.permute.xlu0 %823
        %v825 = vsel %vm484, %v824, 0
        %827 = vmatprep.subr.mxu0 0.0
        %828 = vmatpush1.msra.mxu0 %v473
        %829 = vmatprep.subr.mxu0 0.0
        %830 = vmatpush1.msra.mxu0 %v474
        %831 = vmatprep.subr.mxu0 0.0
        %832 = vmatpush1.msra.mxu0 %v475
        %833 = vmatprep.subr.mxu0 0.0
        %834 = vmatpush1.msra.mxu0 %v476
        %835 = vmatprep.subr.mxu0 0.0
        %836 = vmatpush1.msra.mxu0 0.0
        %837 = vmatprep.subr.mxu0 0.0
        %838 = vmatpush1.msra.mxu0 0.0
        %839 = vmatprep.subr.mxu0 0.0
        %840 = vmatpush1.msra.mxu0 0.0
        %841 = vmatprep.subr.mxu0 0.0
        %842 = vmatpush1.msra.mxu0 0.0
        %843 = vmatprep.subr.mxu0 0.0
        %844 = vmatpush1.msra.mxu0 0.0
        %845 = vmatprep.subr.mxu0 0.0
        %846 = vmatpush1.msra.mxu0 0.0
        %847 = vmatprep.subr.mxu0 0.0
        %848 = vmatpush1.msra.mxu0 0.0
        %849 = vmatprep.subr.mxu0 0.0
        %850 = vmatpush1.msra.mxu0 0.0
        %851 = vmatprep.subr.mxu0 0.0
        %852 = vmatpush1.msra.mxu0 0.0
        %853 = vmatprep.subr.mxu0 0.0
        %854 = vmatpush1.msra.mxu0 0.0
        %855 = vmatprep.subr.mxu0 0.0
        %856 = vmatpush1.msra.mxu0 0.0
        %857 = vmatprep.subr.mxu0 0.0
        %858 = vmatpush1.msra.mxu0 0.0
        %859 = vmatprep.subr.mxu0 0.0
        %860 = vmatpush1.msra.mxu0 0.0
        %861 = vmatprep.subr.mxu0 0.0
        %862 = vmatpush1.msra.mxu0 0.0
        %863 = vmatprep.subr.mxu0 0.0
        %864 = vmatpush1.msra.mxu0 0.0
        %865 = vmatprep.subr.mxu0 0.0
        %866 = vmatpush1.msra.mxu0 0.0
        %867 = vmatprep.subr.mxu0 0.0
        %868 = vmatpush1.msra.mxu0 0.0
        %869 = vmatprep.subr.mxu0 0.0
        %870 = vmatpush1.msra.mxu0 0.0
        %871 = vmatprep.subr.mxu0 0.0
        %872 = vmatpush1.msra.mxu0 0.0
        %873 = vmatprep.subr.mxu0 0.0
        %874 = vmatpush1.msra.mxu0 0.0
        %875 = vmatprep.subr.mxu0 0.0
        %876 = vmatpush1.msra.mxu0 0.0
        %877 = vmatprep.subr.mxu0 0.0
        %878 = vmatpush1.msra.mxu0 0.0
        %879 = vmatprep.subr.mxu0 0.0
        %880 = vmatpush1.msra.mxu0 0.0
        %881 = vmatprep.subr.mxu0 0.0
        %882 = vmatpush1.msra.mxu0 0.0
        %883 = vmatprep.subr.mxu0 0.0
        %884 = vmatpush1.msra.mxu0 0.0
        %885 = vmatprep.subr.mxu0 0.0
        %886 = vmatpush1.msra.mxu0 0.0
        %887 = vmatprep.subr.mxu0 0.0
        %888 = vmatpush1.msra.mxu0 0.0
        %889 = vmatprep.subr.mxu0 0.0
        %890 = vmatpush1.msra.mxu0 0.0
        %891 = vmatprep.mubr.f32.mxu0 0.0
        %892 = vmatmul.mubr.f32.gmra.mrb[0].mxu0 %v825
        %v893 = vpop.f32.mrb[0].mxu0
        %v894 = vadd.f32 0.0, %v893
        %v895 = vpop.f32.mrb[0].mxu0
        %896 = vdwg.mxu0
        %v898 = vrot.slane %v894, 6
        %v899 = vrot.slane %v894, 7
        %v902 = vadd.f32 %v465, %v898
        %v903 = vadd.f32 %v470, %v899
        %v904 = vxor.u32 %v902, 2147483648
        %v905 = vxor.u32 %v903, 2147483648
        %v906 = vmul.f32 %v904, 1.442695
        %v907 = vpow.pop %v906
        %v908 = vmul.f32 %v905, 1.442695
        %v909 = vpow.pop %v908
        %v910 = vadd.f32 %v907, 1.0
        %v911 = vadd.f32 %v909, 1.0
        %v912 = vrcp.pop %v910
        %v913 = vmul.f32 1.0, %v912
        %v914 = vrcp.pop %v911
        %v915 = vmul.f32 1.0, %v914
        %v916 = vadd.f32 %v894, %v577
        %v918 = vrot.slane %v916, 6
        %v919 = vrot.slane %v916, 7
        %920 = vrot.lane.b32.xlu0 %v918, 64
        %v921 = vpop.permute.xlu0 %920
        %922 = vrot.lane.b32.xlu0 %v919, 64
        %v923 = vpop.permute.xlu0 %922
        %v926 = vmul.f32 %v913, %v921
        %v927 = vmul.f32 %v915, %v923
        %930 = vrot.lane.b32.xlu0 %v926, 64
        %v931 = vpop.permute.xlu0 %930
        %932 = vrot.lane.b32.xlu0 %v927, 64
        %v933 = vpop.permute.xlu0 %932
        %v936 = vadd.f32 %v465, %v931
        %v937 = vadd.f32 %v470, %v933
        %v938 = vtanh.pop %v936
        %v939 = vtanh.pop %v937
        %v940 = vsub.f32 1.0, %v913
        %v941 = vsub.f32 1.0, %v915
        %944 = vrot.lane.b32.xlu0 %v938, 96
        %v945 = vpop.permute.xlu0 %944
        %946 = vrot.lane.b32.xlu0 %v939, 96
        %v947 = vpop.permute.xlu0 %946
        %v950 = vmul.f32 %v940, %v945
        %v951 = vmul.f32 %v941, %v947
        %v952 = vrot.slane %v793, 7
        %v953 = vrot.slane %v794, 7
        %v956 = vmul.f32 %v913, %v952
        %v957 = vmul.f32 %v915, %v953
        %v958 = vadd.f32 %v950, %v956
        %v959 = vadd.f32 %v951, %v957
        %v963 = vunpack.c.l.s4 1983009808
        %v964 = vunpack.c.0.s8 %v963
        %v965 = vlaneseq
        %v966 = vshrl.u32 %v965, 7
        %v967 = vsub.s32 %v964, %v966
        %v968 = vrot.slane %v958, %v967
        %v969 = vcombine.high %v968, %v968
        %v971 = vunpack.c.l.s4 1983009808
        %v972 = vunpack.c.0.s8 %v971
        %v973 = vlaneseq
        %v974 = vshrl.u32 %v973, 7
        %v975 = vsub.s32 %v972, %v974
        %v976 = vrot.slane %v959, %v975
        %v977 = vcombine.high %v976, %v976
        %v978 = vsel %vm641, %v969, %v969
        %v979 = vsel %vm643, %v969, %v978
        %v980 = vrot.slane %v977, 7
        %v981 = vsel %vm646, %v980, %v979
        %v982 = vsel %vm648, %v980, %v981
        %v983 = vsel %vm650, %v980, %v982
        %v984 = vsel %vm652, %v980, %v983
        %985 = vrot.lane.b32.xlu0 %v984, 32
        %v986 = vpop.permute.xlu0 %985
        %vm988 = vcmask 779776
        %989 = vst.msk [vmem:[%s365] sm:$0x3] %vm988, %v986
        %v990 = vrot.slane %v958, 2
        %v991 = vrot.slane %v959, 1
        %v992 = vsel %vm646, %v991, %v990
        %993 = vrot.lane.b32.xlu0 %v992, 96
        %v994 = vpop.permute.xlu0 %993
        %v995 = vsel %vm484, %v994, 0
        %997 = vmatprep.subr.mxu0 0.0
        %998 = vmatpush1.msra.mxu0 %v473
        %999 = vmatprep.subr.mxu0 0.0
        %1000 = vmatpush1.msra.mxu0 %v474
        %1001 = vmatprep.subr.mxu0 0.0
        %1002 = vmatpush1.msra.mxu0 %v475
        %1003 = vmatprep.subr.mxu0 0.0
        %1004 = vmatpush1.msra.mxu0 %v476
        %1005 = vmatprep.subr.mxu0 0.0
        %1006 = vmatpush1.msra.mxu0 0.0
        %1007 = vmatprep.subr.mxu0 0.0
        %1008 = vmatpush1.msra.mxu0 0.0
        %1009 = vmatprep.subr.mxu0 0.0
        %1010 = vmatpush1.msra.mxu0 0.0
        %1011 = vmatprep.subr.mxu0 0.0
        %1012 = vmatpush1.msra.mxu0 0.0
        %1013 = vmatprep.subr.mxu0 0.0
        %1014 = vmatpush1.msra.mxu0 0.0
        %1015 = vmatprep.subr.mxu0 0.0
        %1016 = vmatpush1.msra.mxu0 0.0
        %1017 = vmatprep.subr.mxu0 0.0
        %1018 = vmatpush1.msra.mxu0 0.0
        %1019 = vmatprep.subr.mxu0 0.0
        %1020 = vmatpush1.msra.mxu0 0.0
        %1021 = vmatprep.subr.mxu0 0.0
        %1022 = vmatpush1.msra.mxu0 0.0
        %1023 = vmatprep.subr.mxu0 0.0
        %1024 = vmatpush1.msra.mxu0 0.0
        %1025 = vmatprep.subr.mxu0 0.0
        %1026 = vmatpush1.msra.mxu0 0.0
        %1027 = vmatprep.subr.mxu0 0.0
        %1028 = vmatpush1.msra.mxu0 0.0
        %1029 = vmatprep.subr.mxu0 0.0
        %1030 = vmatpush1.msra.mxu0 0.0
        %1031 = vmatprep.subr.mxu0 0.0
        %1032 = vmatpush1.msra.mxu0 0.0
        %1033 = vmatprep.subr.mxu0 0.0
        %1034 = vmatpush1.msra.mxu0 0.0
        %1035 = vmatprep.subr.mxu0 0.0
        %1036 = vmatpush1.msra.mxu0 0.0
        %1037 = vmatprep.subr.mxu0 0.0
        %1038 = vmatpush1.msra.mxu0 0.0
        %1039 = vmatprep.subr.mxu0 0.0
        %1040 = vmatpush1.msra.mxu0 0.0
        %1041 = vmatprep.subr.mxu0 0.0
        %1042 = vmatpush1.msra.mxu0 0.0
        %1043 = vmatprep.subr.mxu0 0.0
        %1044 = vmatpush1.msra.mxu0 0.0
        %1045 = vmatprep.subr.mxu0 0.0
        %1046 = vmatpush1.msra.mxu0 0.0
        %1047 = vmatprep.subr.mxu0 0.0
        %1048 = vmatpush1.msra.mxu0 0.0
        %1049 = vmatprep.subr.mxu0 0.0
        %1050 = vmatpush1.msra.mxu0 0.0
        %1051 = vmatprep.subr.mxu0 0.0
        %1052 = vmatpush1.msra.mxu0 0.0
        %1053 = vmatprep.subr.mxu0 0.0
        %1054 = vmatpush1.msra.mxu0 0.0
        %1055 = vmatprep.subr.mxu0 0.0
        %1056 = vmatpush1.msra.mxu0 0.0
        %1057 = vmatprep.subr.mxu0 0.0
        %1058 = vmatpush1.msra.mxu0 0.0
        %1059 = vmatprep.subr.mxu0 0.0
        %1060 = vmatpush1.msra.mxu0 0.0
        %1061 = vmatprep.mubr.f32.mxu0 0.0
        %1062 = vmatmul.mubr.f32.gmra.mrb[0].mxu0 %v995
        %v1063 = vpop.f32.mrb[0].mxu0
        %v1064 = vadd.f32 0.0, %v1063
        %v1065 = vpop.f32.mrb[0].mxu0
        %1066 = vdwg.mxu0
        %v1068 = vrot.slane %v1064, 5
        %v1069 = vrot.slane %v1064, 6
        %v1072 = vadd.f32 %v465, %v1068
        %v1073 = vadd.f32 %v470, %v1069
        %v1074 = vxor.u32 %v1072, 2147483648
        %v1075 = vxor.u32 %v1073, 2147483648
        %v1076 = vmul.f32 %v1074, 1.442695
        %v1077 = vpow.pop %v1076
        %v1078 = vmul.f32 %v1075, 1.442695
        %v1079 = vpow.pop %v1078
        %v1080 = vadd.f32 %v1077, 1.0
        %v1081 = vadd.f32 %v1079, 1.0
        %v1082 = vrcp.pop %v1080
        %v1083 = vmul.f32 1.0, %v1082
        %v1084 = vrcp.pop %v1081
        %v1085 = vmul.f32 1.0, %v1084
        %v1086 = vadd.f32 %v1064, %v577
        %v1088 = vrot.slane %v1086, 5
        %v1089 = vrot.slane %v1086, 6
        %1090 = vrot.lane.b32.xlu0 %v1088, 64
        %v1091 = vpop.permute.xlu0 %1090
        %1092 = vrot.lane.b32.xlu0 %v1089, 64
        %v1093 = vpop.permute.xlu0 %1092
        %v1096 = vmul.f32 %v1083, %v1091
        %v1097 = vmul.f32 %v1085, %v1093
        %1100 = vrot.lane.b32.xlu0 %v1096, 64
        %v1101 = vpop.permute.xlu0 %1100
        %1102 = vrot.lane.b32.xlu0 %v1097, 64
        %v1103 = vpop.permute.xlu0 %1102
        %v1106 = vadd.f32 %v465, %v1101
        %v1107 = vadd.f32 %v470, %v1103
        %v1108 = vtanh.pop %v1106
        %v1109 = vtanh.pop %v1107
        %v1110 = vsub.f32 1.0, %v1083
        %v1111 = vsub.f32 1.0, %v1085
        %1114 = vrot.lane.b32.xlu0 %v1108, 96
        %v1115 = vpop.permute.xlu0 %1114
        %1116 = vrot.lane.b32.xlu0 %v1109, 96
        %v1117 = vpop.permute.xlu0 %1116
        %v1120 = vmul.f32 %v1110, %v1115
        %v1121 = vmul.f32 %v1111, %v1117
        %v1122 = vrot.slane %v958, 7
        %v1123 = vrot.slane %v959, 7
        %v1126 = vmul.f32 %v1083, %v1122
        %v1127 = vmul.f32 %v1085, %v1123
        %v1128 = vadd.f32 %v1120, %v1126
        %v1129 = vadd.f32 %v1121, %v1127
        %v1133 = vunpack.c.l.s4 1983009808
        %v1134 = vunpack.c.0.s8 %v1133
        %v1135 = vlaneseq
        %v1136 = vshrl.u32 %v1135, 7
        %v1137 = vsub.s32 %v1134, %v1136
        %v1138 = vrot.slane %v1128, %v1137
        %v1139 = vcombine.high %v1138, %v1138
        %v1141 = vunpack.c.l.s4 1983009808
        %v1142 = vunpack.c.0.s8 %v1141
        %v1143 = vlaneseq
        %v1144 = vshrl.u32 %v1143, 7
        %v1145 = vsub.s32 %v1142, %v1144
        %v1146 = vrot.slane %v1129, %v1145
        %v1147 = vcombine.high %v1146, %v1146
        %v1148 = vrot.slane %v1139, 1
        %v1149 = vsel %vm641, %v1148, %v1148
        %v1150 = vsel %vm643, %v1148, %v1149
        %v1151 = vsel %vm646, %v1147, %v1150
        %v1152 = vsel %vm648, %v1147, %v1151
        %v1153 = vsel %vm650, %v1147, %v1152
        %v1154 = vsel %vm652, %v1147, %v1153
        %1155 = vrot.lane.b32.xlu0 %v1154, 64
        %v1156 = vpop.permute.xlu0 %1155
        %vm1158 = vcmask 1042176
        %1159 = vst.msk [vmem:[%s365] sm:$0x3] %vm1158, %v1156
        %v1160 = vrot.slane %v1128, 3
        %v1161 = vrot.slane %v1129, 2
        %v1162 = vsel %vm646, %v1161, %v1160
        %1163 = vrot.lane.b32.xlu0 %v1162, 96
        %v1164 = vpop.permute.xlu0 %1163
        %v1165 = vsel %vm484, %v1164, 0
        %1167 = vmatprep.subr.mxu0 0.0
        %1168 = vmatpush1.msra.mxu0 %v473
        %1169 = vmatprep.subr.mxu0 0.0
        %1170 = vmatpush1.msra.mxu0 %v474
        %1171 = vmatprep.subr.mxu0 0.0
        %1172 = vmatpush1.msra.mxu0 %v475
        %1173 = vmatprep.subr.mxu0 0.0
        %1174 = vmatpush1.msra.mxu0 %v476
        %1175 = vmatprep.subr.mxu0 0.0
        %1176 = vmatpush1.msra.mxu0 0.0
        %1177 = vmatprep.subr.mxu0 0.0
        %1178 = vmatpush1.msra.mxu0 0.0
        %1179 = vmatprep.subr.mxu0 0.0
        %1180 = vmatpush1.msra.mxu0 0.0
        %1181 = vmatprep.subr.mxu0 0.0
        %1182 = vmatpush1.msra.mxu0 0.0
        %1183 = vmatprep.subr.mxu0 0.0
        %1184 = vmatpush1.msra.mxu0 0.0
        %1185 = vmatprep.subr.mxu0 0.0
        %1186 = vmatpush1.msra.mxu0 0.0
        %1187 = vmatprep.subr.mxu0 0.0
        %1188 = vmatpush1.msra.mxu0 0.0
        %1189 = vmatprep.subr.mxu0 0.0
        %1190 = vmatpush1.msra.mxu0 0.0
        %1191 = vmatprep.subr.mxu0 0.0
        %1192 = vmatpush1.msra.mxu0 0.0
        %1193 = vmatprep.subr.mxu0 0.0
        %1194 = vmatpush1.msra.mxu0 0.0
        %1195 = vmatprep.subr.mxu0 0.0
        %1196 = vmatpush1.msra.mxu0 0.0
        %1197 = vmatprep.subr.mxu0 0.0
        %1198 = vmatpush1.msra.mxu0 0.0
        %1199 = vmatprep.subr.mxu0 0.0
        %1200 = vmatpush1.msra.mxu0 0.0
        %1201 = vmatprep.subr.mxu0 0.0
        %1202 = vmatpush1.msra.mxu0 0.0
        %1203 = vmatprep.subr.mxu0 0.0
        %1204 = vmatpush1.msra.mxu0 0.0
        %1205 = vmatprep.subr.mxu0 0.0
        %1206 = vmatpush1.msra.mxu0 0.0
        %1207 = vmatprep.subr.mxu0 0.0
        %1208 = vmatpush1.msra.mxu0 0.0
        %1209 = vmatprep.subr.mxu0 0.0
        %1210 = vmatpush1.msra.mxu0 0.0
        %1211 = vmatprep.subr.mxu0 0.0
        %1212 = vmatpush1.msra.mxu0 0.0
        %1213 = vmatprep.subr.mxu0 0.0
        %1214 = vmatpush1.msra.mxu0 0.0
        %1215 = vmatprep.subr.mxu0 0.0
        %1216 = vmatpush1.msra.mxu0 0.0
        %1217 = vmatprep.subr.mxu0 0.0
        %1218 = vmatpush1.msra.mxu0 0.0
        %1219 = vmatprep.subr.mxu0 0.0
        %1220 = vmatpush1.msra.mxu0 0.0
        %1221 = vmatprep.subr.mxu0 0.0
        %1222 = vmatpush1.msra.mxu0 0.0
        %1223 = vmatprep.subr.mxu0 0.0
        %1224 = vmatpush1.msra.mxu0 0.0
        %1225 = vmatprep.subr.mxu0 0.0
        %1226 = vmatpush1.msra.mxu0 0.0
        %1227 = vmatprep.subr.mxu0 0.0
        %1228 = vmatpush1.msra.mxu0 0.0
        %1229 = vmatprep.subr.mxu0 0.0
        %1230 = vmatpush1.msra.mxu0 0.0
        %1231 = vmatprep.mubr.f32.mxu0 0.0
        %1232 = vmatmul.mubr.f32.gmra.mrb[0].mxu0 %v1165
        %v1233 = vpop.f32.mrb[0].mxu0
        %v1234 = vadd.f32 0.0, %v1233
        %v1235 = vpop.f32.mrb[0].mxu0
        %1236 = vdwg.mxu0
        %v1238 = vrot.slane %v1234, 4
        %v1239 = vrot.slane %v1234, 5
        %v1242 = vadd.f32 %v465, %v1238
        %v1243 = vadd.f32 %v470, %v1239
        %v1244 = vxor.u32 %v1242, 2147483648
        %v1245 = vxor.u32 %v1243, 2147483648
        %v1246 = vmul.f32 %v1244, 1.442695
        %v1247 = vpow.pop %v1246
        %v1248 = vmul.f32 %v1245, 1.442695
        %v1249 = vpow.pop %v1248
        %v1250 = vadd.f32 %v1247, 1.0
        %v1251 = vadd.f32 %v1249, 1.0
        %v1252 = vrcp.pop %v1250
        %v1253 = vmul.f32 1.0, %v1252
        %v1254 = vrcp.pop %v1251
        %v1255 = vmul.f32 1.0, %v1254
        %v1256 = vadd.f32 %v1234, %v577
        %v1258 = vrot.slane %v1256, 4
        %v1259 = vrot.slane %v1256, 5
        %1260 = vrot.lane.b32.xlu0 %v1258, 64
        %v1261 = vpop.permute.xlu0 %1260
        %1262 = vrot.lane.b32.xlu0 %v1259, 64
        %v1263 = vpop.permute.xlu0 %1262
        %v1266 = vmul.f32 %v1253, %v1261
        %v1267 = vmul.f32 %v1255, %v1263
        %1270 = vrot.lane.b32.xlu0 %v1266, 64
        %v1271 = vpop.permute.xlu0 %1270
        %1272 = vrot.lane.b32.xlu0 %v1267, 64
        %v1273 = vpop.permute.xlu0 %1272
        %v1276 = vadd.f32 %v465, %v1271
        %v1277 = vadd.f32 %v470, %v1273
        %v1278 = vtanh.pop %v1276
        %v1279 = vtanh.pop %v1277
        %v1280 = vsub.f32 1.0, %v1253
        %v1281 = vsub.f32 1.0, %v1255
        %1284 = vrot.lane.b32.xlu0 %v1278, 96
        %v1285 = vpop.permute.xlu0 %1284
        %1286 = vrot.lane.b32.xlu0 %v1279, 96
        %v1287 = vpop.permute.xlu0 %1286
        %v1290 = vmul.f32 %v1280, %v1285
        %v1291 = vmul.f32 %v1281, %v1287
        %v1292 = vrot.slane %v1128, 7
        %v1293 = vrot.slane %v1129, 7
        %v1296 = vmul.f32 %v1253, %v1292
        %v1297 = vmul.f32 %v1255, %v1293
        %v1298 = vadd.f32 %v1290, %v1296
        %v1299 = vadd.f32 %v1291, %v1297
        %v1302 = vcombine.high %v1298, %v1298
        %v1304 = vunpack.c.l.s4 1983009808
        %v1305 = vunpack.c.0.s8 %v1304
        %v1306 = vlaneseq
        %v1307 = vshrl.u32 %v1306, 7
        %v1308 = vsub.s32 %v1305, %v1307
        %v1309 = vrot.slane %v1302, %v1308
        %v1310 = vcombine.high %v1299, %v1299
        %v1312 = vunpack.c.l.s4 1983009808
        %v1313 = vunpack.c.0.s8 %v1312
        %v1314 = vlaneseq
        %v1315 = vshrl.u32 %v1314, 7
        %v1316 = vsub.s32 %v1313, %v1315
        %v1317 = vrot.slane %v1310, %v1316
        %v1318 = vsel %vm641, %v1309, %v1309
        %v1319 = vsel %vm643, %v1309, %v1318
        %v1320 = vrot.slane %v1317, 7
        %v1321 = vsel %vm646, %v1320, %v1319
        %v1322 = vsel %vm648, %v1320, %v1321
        %v1323 = vsel %vm650, %v1320, %v1322
        %v1324 = vsel %vm652, %v1320, %v1323
        %1325 = vrot.lane.b32.xlu0 %v1324, 96
        %v1326 = vpop.permute.xlu0 %1325
        %1328 = vst.msk [vmem:[%s365 + $0x2] sm:$0x3] %vm657, %v1326
        %v1329 = vrot.slane %v1298, 4
        %v1330 = vrot.slane %v1299, 3
        %v1331 = vsel %vm646, %v1330, %v1329
        %1332 = vrot.lane.b32.xlu0 %v1331, 96
        %v1333 = vpop.permute.xlu0 %1332
        %v1334 = vsel %vm484, %v1333, 0
        %1336 = vmatprep.subr.mxu0 0.0
        %1337 = vmatpush1.msra.mxu0 %v473
        %1338 = vmatprep.subr.mxu0 0.0
        %1339 = vmatpush1.msra.mxu0 %v474
        %1340 = vmatprep.subr.mxu0 0.0
        %1341 = vmatpush1.msra.mxu0 %v475
        %1342 = vmatprep.subr.mxu0 0.0
        %1343 = vmatpush1.msra.mxu0 %v476
        %1344 = vmatprep.subr.mxu0 0.0
        %1345 = vmatpush1.msra.mxu0 0.0
        %1346 = vmatprep.subr.mxu0 0.0
        %1347 = vmatpush1.msra.mxu0 0.0
        %1348 = vmatprep.subr.mxu0 0.0
        %1349 = vmatpush1.msra.mxu0 0.0
        %1350 = vmatprep.subr.mxu0 0.0
        %1351 = vmatpush1.msra.mxu0 0.0
        %1352 = vmatprep.subr.mxu0 0.0
        %1353 = vmatpush1.msra.mxu0 0.0
        %1354 = vmatprep.subr.mxu0 0.0
        %1355 = vmatpush1.msra.mxu0 0.0
        %1356 = vmatprep.subr.mxu0 0.0
        %1357 = vmatpush1.msra.mxu0 0.0
        %1358 = vmatprep.subr.mxu0 0.0
        %1359 = vmatpush1.msra.mxu0 0.0
        %1360 = vmatprep.subr.mxu0 0.0
        %1361 = vmatpush1.msra.mxu0 0.0
        %1362 = vmatprep.subr.mxu0 0.0
        %1363 = vmatpush1.msra.mxu0 0.0
        %1364 = vmatprep.subr.mxu0 0.0
        %1365 = vmatpush1.msra.mxu0 0.0
        %1366 = vmatprep.subr.mxu0 0.0
        %1367 = vmatpush1.msra.mxu0 0.0
        %1368 = vmatprep.subr.mxu0 0.0
        %1369 = vmatpush1.msra.mxu0 0.0
        %1370 = vmatprep.subr.mxu0 0.0
        %1371 = vmatpush1.msra.mxu0 0.0
        %1372 = vmatprep.subr.mxu0 0.0
        %1373 = vmatpush1.msra.mxu0 0.0
        %1374 = vmatprep.subr.mxu0 0.0
        %1375 = vmatpush1.msra.mxu0 0.0
        %1376 = vmatprep.subr.mxu0 0.0
        %1377 = vmatpush1.msra.mxu0 0.0
        %1378 = vmatprep.subr.mxu0 0.0
        %1379 = vmatpush1.msra.mxu0 0.0
        %1380 = vmatprep.subr.mxu0 0.0
        %1381 = vmatpush1.msra.mxu0 0.0
        %1382 = vmatprep.subr.mxu0 0.0
        %1383 = vmatpush1.msra.mxu0 0.0
        %1384 = vmatprep.subr.mxu0 0.0
        %1385 = vmatpush1.msra.mxu0 0.0
        %1386 = vmatprep.subr.mxu0 0.0
        %1387 = vmatpush1.msra.mxu0 0.0
        %1388 = vmatprep.subr.mxu0 0.0
        %1389 = vmatpush1.msra.mxu0 0.0
        %1390 = vmatprep.subr.mxu0 0.0
        %1391 = vmatpush1.msra.mxu0 0.0
        %1392 = vmatprep.subr.mxu0 0.0
        %1393 = vmatpush1.msra.mxu0 0.0
        %1394 = vmatprep.subr.mxu0 0.0
        %1395 = vmatpush1.msra.mxu0 0.0
        %1396 = vmatprep.subr.mxu0 0.0
        %1397 = vmatpush1.msra.mxu0 0.0
        %1398 = vmatprep.subr.mxu0 0.0
        %1399 = vmatpush1.msra.mxu0 0.0
        %1400 = vmatprep.mubr.f32.mxu0 0.0
        %1401 = vmatmul.mubr.f32.gmra.mrb[0].mxu0 %v1334
        %v1402 = vpop.f32.mrb[0].mxu0
        %v1403 = vadd.f32 0.0, %v1402
        %v1404 = vpop.f32.mrb[0].mxu0
        %1405 = vdwg.mxu0
        %v1407 = vrot.slane %v1403, 3
        %v1408 = vrot.slane %v1403, 4
        %v1411 = vadd.f32 %v465, %v1407
        %v1412 = vadd.f32 %v470, %v1408
        %v1413 = vxor.u32 %v1411, 2147483648
        %v1414 = vxor.u32 %v1412, 2147483648
        %v1415 = vmul.f32 %v1413, 1.442695
        %v1416 = vpow.pop %v1415
        %v1417 = vmul.f32 %v1414, 1.442695
        %v1418 = vpow.pop %v1417
        %v1419 = vadd.f32 %v1416, 1.0
        %v1420 = vadd.f32 %v1418, 1.0
        %v1421 = vrcp.pop %v1419
        %v1422 = vmul.f32 1.0, %v1421
        %v1423 = vrcp.pop %v1420
        %v1424 = vmul.f32 1.0, %v1423
        %v1425 = vadd.f32 %v1403, %v577
        %v1427 = vrot.slane %v1425, 3
        %v1428 = vrot.slane %v1425, 4
        %1429 = vrot.lane.b32.xlu0 %v1427, 64
        %v1430 = vpop.permute.xlu0 %1429
        %1431 = vrot.lane.b32.xlu0 %v1428, 64
        %v1432 = vpop.permute.xlu0 %1431
        %v1435 = vmul.f32 %v1422, %v1430
        %v1436 = vmul.f32 %v1424, %v1432
        %1439 = vrot.lane.b32.xlu0 %v1435, 64
        %v1440 = vpop.permute.xlu0 %1439
        %1441 = vrot.lane.b32.xlu0 %v1436, 64
        %v1442 = vpop.permute.xlu0 %1441
        %v1445 = vadd.f32 %v465, %v1440
        %v1446 = vadd.f32 %v470, %v1442
        %v1447 = vtanh.pop %v1445
        %v1448 = vtanh.pop %v1446
        %v1449 = vsub.f32 1.0, %v1422
        %v1450 = vsub.f32 1.0, %v1424
        %1453 = vrot.lane.b32.xlu0 %v1447, 96
        %v1454 = vpop.permute.xlu0 %1453
        %1455 = vrot.lane.b32.xlu0 %v1448, 96
        %v1456 = vpop.permute.xlu0 %1455
        %v1459 = vmul.f32 %v1449, %v1454
        %v1460 = vmul.f32 %v1450, %v1456
        %v1461 = vrot.slane %v1298, 7
        %v1462 = vrot.slane %v1299, 7
        %v1465 = vmul.f32 %v1422, %v1461
        %v1466 = vmul.f32 %v1424, %v1462
        %v1467 = vadd.f32 %v1459, %v1465
        %v1468 = vadd.f32 %v1460, %v1466
        %v1471 = vcombine.high %v1467, %v1467
        %v1473 = vunpack.c.l.s4 1983009808
        %v1474 = vunpack.c.0.s8 %v1473
        %v1475 = vlaneseq
        %v1476 = vshrl.u32 %v1475, 7
        %v1477 = vsub.s32 %v1474, %v1476
        %v1478 = vrot.slane %v1471, %v1477
        %v1479 = vcombine.high %v1468, %v1468
        %v1481 = vunpack.c.l.s4 1983009808
        %v1482 = vunpack.c.0.s8 %v1481
        %v1483 = vlaneseq
        %v1484 = vshrl.u32 %v1483, 7
        %v1485 = vsub.s32 %v1482, %v1484
        %v1486 = vrot.slane %v1479, %v1485
        %v1487 = vrot.slane %v1478, 1
        %v1488 = vsel %vm641, %v1487, %v1487
        %v1489 = vsel %vm643, %v1487, %v1488
        %v1490 = vsel %vm646, %v1486, %v1489
        %v1491 = vsel %vm648, %v1486, %v1490
        %v1492 = vsel %vm650, %v1486, %v1491
        %v1493 = vsel %vm652, %v1486, %v1492
        %1495 = vst.msk [vmem:[%s365 + $0x2] sm:$0x3] %vm819, %v1493
        %v1496 = vrot.slane %v1467, 5
        %v1497 = vrot.slane %v1468, 4
        %v1498 = vsel %vm646, %v1497, %v1496
        %1499 = vrot.lane.b32.xlu0 %v1498, 96
        %v1500 = vpop.permute.xlu0 %1499
        %v1501 = vsel %vm484, %v1500, 0
        %1503 = vmatprep.subr.mxu0 0.0
        %1504 = vmatpush1.msra.mxu0 %v473
        %1505 = vmatprep.subr.mxu0 0.0
        %1506 = vmatpush1.msra.mxu0 %v474
        %1507 = vmatprep.subr.mxu0 0.0
        %1508 = vmatpush1.msra.mxu0 %v475
        %1509 = vmatprep.subr.mxu0 0.0
        %1510 = vmatpush1.msra.mxu0 %v476
        %1511 = vmatprep.subr.mxu0 0.0
        %1512 = vmatpush1.msra.mxu0 0.0
        %1513 = vmatprep.subr.mxu0 0.0
        %1514 = vmatpush1.msra.mxu0 0.0
        %1515 = vmatprep.subr.mxu0 0.0
        %1516 = vmatpush1.msra.mxu0 0.0
        %1517 = vmatprep.subr.mxu0 0.0
        %1518 = vmatpush1.msra.mxu0 0.0
        %1519 = vmatprep.subr.mxu0 0.0
        %1520 = vmatpush1.msra.mxu0 0.0
        %1521 = vmatprep.subr.mxu0 0.0
        %1522 = vmatpush1.msra.mxu0 0.0
        %1523 = vmatprep.subr.mxu0 0.0
        %1524 = vmatpush1.msra.mxu0 0.0
        %1525 = vmatprep.subr.mxu0 0.0
        %1526 = vmatpush1.msra.mxu0 0.0
        %1527 = vmatprep.subr.mxu0 0.0
        %1528 = vmatpush1.msra.mxu0 0.0
        %1529 = vmatprep.subr.mxu0 0.0
        %1530 = vmatpush1.msra.mxu0 0.0
        %1531 = vmatprep.subr.mxu0 0.0
        %1532 = vmatpush1.msra.mxu0 0.0
        %1533 = vmatprep.subr.mxu0 0.0
        %1534 = vmatpush1.msra.mxu0 0.0
        %1535 = vmatprep.subr.mxu0 0.0
        %1536 = vmatpush1.msra.mxu0 0.0
        %1537 = vmatprep.subr.mxu0 0.0
        %1538 = vmatpush1.msra.mxu0 0.0
        %1539 = vmatprep.subr.mxu0 0.0
        %1540 = vmatpush1.msra.mxu0 0.0
        %1541 = vmatprep.subr.mxu0 0.0
        %1542 = vmatpush1.msra.mxu0 0.0
        %1543 = vmatprep.subr.mxu0 0.0
        %1544 = vmatpush1.msra.mxu0 0.0
        %1545 = vmatprep.subr.mxu0 0.0
        %1546 = vmatpush1.msra.mxu0 0.0
        %1547 = vmatprep.subr.mxu0 0.0
        %1548 = vmatpush1.msra.mxu0 0.0
        %1549 = vmatprep.subr.mxu0 0.0
        %1550 = vmatpush1.msra.mxu0 0.0
        %1551 = vmatprep.subr.mxu0 0.0
        %1552 = vmatpush1.msra.mxu0 0.0
        %1553 = vmatprep.subr.mxu0 0.0
        %1554 = vmatpush1.msra.mxu0 0.0
        %1555 = vmatprep.subr.mxu0 0.0
        %1556 = vmatpush1.msra.mxu0 0.0
        %1557 = vmatprep.subr.mxu0 0.0
        %1558 = vmatpush1.msra.mxu0 0.0
        %1559 = vmatprep.subr.mxu0 0.0
        %1560 = vmatpush1.msra.mxu0 0.0
        %1561 = vmatprep.subr.mxu0 0.0
        %1562 = vmatpush1.msra.mxu0 0.0
        %1563 = vmatprep.subr.mxu0 0.0
        %1564 = vmatpush1.msra.mxu0 0.0
        %1565 = vmatprep.subr.mxu0 0.0
        %1566 = vmatpush1.msra.mxu0 0.0
        %1567 = vmatprep.mubr.f32.mxu0 0.0
        %1568 = vmatmul.mubr.f32.gmra.mrb[0].mxu0 %v1501
        %v1569 = vpop.f32.mrb[0].mxu0
        %v1570 = vadd.f32 0.0, %v1569
        %v1571 = vpop.f32.mrb[0].mxu0
        %1572 = vdwg.mxu0
        %v1574 = vrot.slane %v1570, 2
        %v1575 = vrot.slane %v1570, 3
        %v1578 = vadd.f32 %v465, %v1574
        %v1579 = vadd.f32 %v470, %v1575
        %v1580 = vxor.u32 %v1578, 2147483648
        %v1581 = vxor.u32 %v1579, 2147483648
        %v1582 = vmul.f32 %v1580, 1.442695
        %v1583 = vpow.pop %v1582
        %v1584 = vmul.f32 %v1581, 1.442695
        %v1585 = vpow.pop %v1584
        %v1586 = vadd.f32 %v1583, 1.0
        %v1587 = vadd.f32 %v1585, 1.0
        %v1588 = vrcp.pop %v1586
        %v1589 = vmul.f32 1.0, %v1588
        %v1590 = vrcp.pop %v1587
        %v1591 = vmul.f32 1.0, %v1590
        %v1592 = vadd.f32 %v1570, %v577
        %v1594 = vrot.slane %v1592, 2
        %v1595 = vrot.slane %v1592, 3
        %1596 = vrot.lane.b32.xlu0 %v1594, 64
        %v1597 = vpop.permute.xlu0 %1596
        %1598 = vrot.lane.b32.xlu0 %v1595, 64
        %v1599 = vpop.permute.xlu0 %1598
        %v1602 = vmul.f32 %v1589, %v1597
        %v1603 = vmul.f32 %v1591, %v1599
        %1606 = vrot.lane.b32.xlu0 %v1602, 64
        %v1607 = vpop.permute.xlu0 %1606
        %1608 = vrot.lane.b32.xlu0 %v1603, 64
        %v1609 = vpop.permute.xlu0 %1608
        %v1612 = vadd.f32 %v465, %v1607
        %v1613 = vadd.f32 %v470, %v1609
        %v1614 = vtanh.pop %v1612
        %v1615 = vtanh.pop %v1613
        %v1616 = vsub.f32 1.0, %v1589
        %v1617 = vsub.f32 1.0, %v1591
        %1620 = vrot.lane.b32.xlu0 %v1614, 96
        %v1621 = vpop.permute.xlu0 %1620
        %1622 = vrot.lane.b32.xlu0 %v1615, 96
        %v1623 = vpop.permute.xlu0 %1622
        %v1626 = vmul.f32 %v1616, %v1621
        %v1627 = vmul.f32 %v1617, %v1623
        %v1628 = vrot.slane %v1467, 7
        %v1629 = vrot.slane %v1468, 7
        %v1632 = vmul.f32 %v1589, %v1628
        %v1633 = vmul.f32 %v1591, %v1629
        %v1634 = vadd.f32 %v1626, %v1632
        %v1635 = vadd.f32 %v1627, %v1633
        %v1638 = vcombine.high %v1634, %v1634
        %v1640 = vunpack.c.l.s4 1983009808
        %v1641 = vunpack.c.0.s8 %v1640
        %v1642 = vlaneseq
        %v1643 = vshrl.u32 %v1642, 7
        %v1644 = vsub.s32 %v1641, %v1643
        %v1645 = vrot.slane %v1638, %v1644
        %v1646 = vcombine.high %v1645, %v1645
        %v1647 = vcombine.high %v1635, %v1635
        %v1649 = vunpack.c.l.s4 1983009808
        %v1650 = vunpack.c.0.s8 %v1649
        %v1651 = vlaneseq
        %v1652 = vshrl.u32 %v1651, 7
        %v1653 = vsub.s32 %v1650, %v1652
        %v1654 = vrot.slane %v1647, %v1653
        %v1655 = vcombine.high %v1654, %v1654
        %v1656 = vsel %vm641, %v1646, %v1646
        %v1657 = vsel %vm643, %v1646, %v1656
        %v1658 = vrot.slane %v1655, 7
        %v1659 = vsel %vm646, %v1658, %v1657
        %v1660 = vsel %vm648, %v1658, %v1659
        %v1661 = vsel %vm650, %v1658, %v1660
        %v1662 = vsel %vm652, %v1658, %v1661
        %1663 = vrot.lane.b32.xlu0 %v1662, 32
        %v1664 = vpop.permute.xlu0 %1663
        %1666 = vst.msk [vmem:[%s365 + $0x2] sm:$0x3] %vm988, %v1664
        %v1667 = vrot.slane %v1634, 6
        %v1668 = vrot.slane %v1635, 5
        %v1669 = vsel %vm646, %v1668, %v1667
        %1670 = vrot.lane.b32.xlu0 %v1669, 96
        %v1671 = vpop.permute.xlu0 %1670
        %v1672 = vsel %vm484, %v1671, 0
        %1674 = vmatprep.subr.mxu0 0.0
        %1675 = vmatpush1.msra.mxu0 %v473
        %1676 = vmatprep.subr.mxu0 0.0
        %1677 = vmatpush1.msra.mxu0 %v474
        %1678 = vmatprep.subr.mxu0 0.0
        %1679 = vmatpush1.msra.mxu0 %v475
        %1680 = vmatprep.subr.mxu0 0.0
        %1681 = vmatpush1.msra.mxu0 %v476
        %1682 = vmatprep.subr.mxu0 0.0
        %1683 = vmatpush1.msra.mxu0 0.0
        %1684 = vmatprep.subr.mxu0 0.0
        %1685 = vmatpush1.msra.mxu0 0.0
        %1686 = vmatprep.subr.mxu0 0.0
        %1687 = vmatpush1.msra.mxu0 0.0
        %1688 = vmatprep.subr.mxu0 0.0
        %1689 = vmatpush1.msra.mxu0 0.0
        %1690 = vmatprep.subr.mxu0 0.0
        %1691 = vmatpush1.msra.mxu0 0.0
        %1692 = vmatprep.subr.mxu0 0.0
        %1693 = vmatpush1.msra.mxu0 0.0
        %1694 = vmatprep.subr.mxu0 0.0
        %1695 = vmatpush1.msra.mxu0 0.0
        %1696 = vmatprep.subr.mxu0 0.0
        %1697 = vmatpush1.msra.mxu0 0.0
        %1698 = vmatprep.subr.mxu0 0.0
        %1699 = vmatpush1.msra.mxu0 0.0
        %1700 = vmatprep.subr.mxu0 0.0
        %1701 = vmatpush1.msra.mxu0 0.0
        %1702 = vmatprep.subr.mxu0 0.0
        %1703 = vmatpush1.msra.mxu0 0.0
        %1704 = vmatprep.subr.mxu0 0.0
        %1705 = vmatpush1.msra.mxu0 0.0
        %1706 = vmatprep.subr.mxu0 0.0
        %1707 = vmatpush1.msra.mxu0 0.0
        %1708 = vmatprep.subr.mxu0 0.0
        %1709 = vmatpush1.msra.mxu0 0.0
        %1710 = vmatprep.subr.mxu0 0.0
        %1711 = vmatpush1.msra.mxu0 0.0
        %1712 = vmatprep.subr.mxu0 0.0
        %1713 = vmatpush1.msra.mxu0 0.0
        %1714 = vmatprep.subr.mxu0 0.0
        %1715 = vmatpush1.msra.mxu0 0.0
        %1716 = vmatprep.subr.mxu0 0.0
        %1717 = vmatpush1.msra.mxu0 0.0
        %1718 = vmatprep.subr.mxu0 0.0
        %1719 = vmatpush1.msra.mxu0 0.0
        %1720 = vmatprep.subr.mxu0 0.0
        %1721 = vmatpush1.msra.mxu0 0.0
        %1722 = vmatprep.subr.mxu0 0.0
        %1723 = vmatpush1.msra.mxu0 0.0
        %1724 = vmatprep.subr.mxu0 0.0
        %1725 = vmatpush1.msra.mxu0 0.0
        %1726 = vmatprep.subr.mxu0 0.0
        %1727 = vmatpush1.msra.mxu0 0.0
        %1728 = vmatprep.subr.mxu0 0.0
        %1729 = vmatpush1.msra.mxu0 0.0
        %1730 = vmatprep.subr.mxu0 0.0
        %1731 = vmatpush1.msra.mxu0 0.0
        %1732 = vmatprep.subr.mxu0 0.0
        %1733 = vmatpush1.msra.mxu0 0.0
        %1734 = vmatprep.subr.mxu0 0.0
        %1735 = vmatpush1.msra.mxu0 0.0
        %1736 = vmatprep.subr.mxu0 0.0
        %1737 = vmatpush1.msra.mxu0 0.0
        %1738 = vmatprep.mubr.f32.mxu0 0.0
        %1739 = vmatmul.mubr.f32.gmra.mrb[0].mxu0 %v1672
        %v1740 = vpop.f32.mrb[0].mxu0
        %v1741 = vadd.f32 0.0, %v1740
        %v1742 = vpop.f32.mrb[0].mxu0
        %1743 = vdwg.mxu0
        %v1745 = vrot.slane %v1741, 1
        %v1746 = vrot.slane %v1741, 2
        %v1749 = vadd.f32 %v465, %v1745
        %v1750 = vadd.f32 %v470, %v1746
        %v1751 = vxor.u32 %v1749, 2147483648
        %v1752 = vxor.u32 %v1750, 2147483648
        %v1753 = vmul.f32 %v1751, 1.442695
        %v1754 = vpow.pop %v1753
        %v1755 = vmul.f32 %v1752, 1.442695
        %v1756 = vpow.pop %v1755
        %v1757 = vadd.f32 %v1754, 1.0
        %v1758 = vadd.f32 %v1756, 1.0
        %v1759 = vrcp.pop %v1757
        %v1760 = vmul.f32 1.0, %v1759
        %v1761 = vrcp.pop %v1758
        %v1762 = vmul.f32 1.0, %v1761
        %v1763 = vadd.f32 %v1741, %v577
        %v1765 = vrot.slane %v1763, 1
        %v1766 = vrot.slane %v1763, 2
        %1767 = vrot.lane.b32.xlu0 %v1765, 64
        %v1768 = vpop.permute.xlu0 %1767
        %1769 = vrot.lane.b32.xlu0 %v1766, 64
        %v1770 = vpop.permute.xlu0 %1769
        %v1773 = vmul.f32 %v1760, %v1768
        %v1774 = vmul.f32 %v1762, %v1770
        %1777 = vrot.lane.b32.xlu0 %v1773, 64
        %v1778 = vpop.permute.xlu0 %1777
        %1779 = vrot.lane.b32.xlu0 %v1774, 64
        %v1780 = vpop.permute.xlu0 %1779
        %v1783 = vadd.f32 %v465, %v1778
        %v1784 = vadd.f32 %v470, %v1780
        %v1785 = vtanh.pop %v1783
        %v1786 = vtanh.pop %v1784
        %v1787 = vsub.f32 1.0, %v1760
        %v1788 = vsub.f32 1.0, %v1762
        %1791 = vrot.lane.b32.xlu0 %v1785, 96
        %v1792 = vpop.permute.xlu0 %1791
        %1793 = vrot.lane.b32.xlu0 %v1786, 96
        %v1794 = vpop.permute.xlu0 %1793
        %v1797 = vmul.f32 %v1787, %v1792
        %v1798 = vmul.f32 %v1788, %v1794
        %v1799 = vrot.slane %v1634, 7
        %v1800 = vrot.slane %v1635, 7
        %v1803 = vmul.f32 %v1760, %v1799
        %v1804 = vmul.f32 %v1762, %v1800
        %v1805 = vadd.f32 %v1797, %v1803
        %v1806 = vadd.f32 %v1798, %v1804
        %v1809 = vcombine.high %v1805, %v1805
        %v1811 = vunpack.c.l.s4 1983009808
        %v1812 = vunpack.c.0.s8 %v1811
        %v1813 = vlaneseq
        %v1814 = vshrl.u32 %v1813, 7
        %v1815 = vsub.s32 %v1812, %v1814
        %v1816 = vrot.slane %v1809, %v1815
        %v1817 = vcombine.high %v1816, %v1816
        %v1818 = vcombine.high %v1806, %v1806
        %v1820 = vunpack.c.l.s4 1983009808
        %v1821 = vunpack.c.0.s8 %v1820
        %v1822 = vlaneseq
        %v1823 = vshrl.u32 %v1822, 7
        %v1824 = vsub.s32 %v1821, %v1823
        %v1825 = vrot.slane %v1818, %v1824
        %v1826 = vcombine.high %v1825, %v1825
        %v1827 = vrot.slane %v1817, 1
        %v1828 = vsel %vm641, %v1827, %v1827
        %v1829 = vsel %vm643, %v1827, %v1828
        %v1830 = vsel %vm646, %v1826, %v1829
        %v1831 = vsel %vm648, %v1826, %v1830
        %v1832 = vsel %vm650, %v1826, %v1831
        %v1833 = vsel %vm652, %v1826, %v1832
        %1834 = vrot.lane.b32.xlu0 %v1833, 64
        %v1835 = vpop.permute.xlu0 %1834
        %1837 = vst.msk [vmem:[%s365 + $0x2] sm:$0x3] %vm1158, %v1835
        %v1838 = vrot.slane %v1806, 7
        %1839 = vrot.lane.b32.xlu0 %v1805, 96
        %v1840 = vpop.permute.xlu0 %1839
        %1841 = vrot.lane.b32.xlu0 %v1838, 96
        %v1842 = vpop.permute.xlu0 %1841
        %vm1845 = vcmask 261127
        %1846 = vst.msk [vmem:[#allocation2 - $0x7] sm:$0x80] %vm1845, %v1840
        %vm1847 = vcmask 253952
        %1848 = vst.msk [vmem:[#allocation2 + $0x1] sm:$0x1] %vm1847, %v1842
        %p1849 = scmp.eq.s32.totalorder %s25, 1
        // Predicated region
        $region87: #{_gru_pallas.1} parent=77 // pred_check
          %p1850 = pneg %p1849
        $region88: #{_gru_pallas.1} parent=77 // pred_check_branch
          %1852 = sbr.rel (%p1850) target = $region90
        $region89: #{_gru_pallas.1} parent=77 // pred_region
          %1853 = vst.msk [vmem:[#allocation4 - $0x7] sm:$0x80] %vm1845, %v1840
          %1854 = vst.msk [vmem:[#allocation4 + $0x1] sm:$0x1] %vm1847, %v1842
        $region90: #{_gru_pallas.1} parent=77 // pred_fallthru
          _
        %p1855 = scmp.lt.s32.totalorder %s25, 1
        %s1856 = scalar_select %p1855, %s25, 1
        %p1857 = scmp.lt.s32.totalorder %s24, 0
        %s1858 = scalar_select %p1857, %s24, 0
        %s1859 = smul.addr %s1858, 2
        %s1860 = smul.addr %s1856, 2
        %s1861 = sadd.s32 %s1859, %s1860
        %s1862 = smul.addr %s1861, 2
        %s1863 = scalar_lea.vmem %s6, %s1862
        // Predicated region
        $region91: #{_gru_pallas.1} parent=77 // pred_check
          %p1864 = pneg %p190
        $region92: #{_gru_pallas.1} parent=77 // pred_check_branch
          %1866 = sbr.rel (%p1864) target = $region94
        $region93: #{_gru_pallas.1} parent=77 // pred_region
          _
        $region94: #{_gru_pallas.1} parent=77 // pred_fallthru
          _
        // Predicated region
        $region95: #{_gru_pallas.1} parent=77 // pred_check
          %p1867 = pneg %p216
        $region96: #{_gru_pallas.1} parent=77 // pred_check_branch
          %1869 = sbr.rel (%p1867) target = $region98
        $region97: #{_gru_pallas.1} parent=77 // pred_region
          %s1871 = ssub.s32 32, 32
          %1872 = vsyncadd [#allocation5], %s1871
          %s1873 = smul.addr %s24, 32
          %s1874 = scalar_lea.hbm %s7, %s1873
          %s1876 = sshll.u32 [#allocation4], 4
          %s1877 = int_to_ptr.vmem [resolvable:$true] %s1876
          %1879 = dma.vmem_to_hbm [thread:$0]  %s1877, 32, %s1874, [#allocation5]
        $region98: #{_gru_pallas.1} parent=77 // pred_fallthru
          _
        // Predicated region
        $region99: #{_gru_pallas.1} parent=77 // pred_check
          %p1880 = pneg %p216
        $region100: #{_gru_pallas.1} parent=77 // pred_check_branch
          %1882 = sbr.rel (%p1880) target = $region102
        $region101: #{_gru_pallas.1} parent=77 // pred_region
          %1883 = dma.done [#allocation5], 32
        $region102: #{_gru_pallas.1} parent=77 // pred_fallthru
          _
      $region78: #{_gru_pallas.1} parent=5 // pred_fallthru
        _
      %p1884 = scmp.le.s32.totalorder 2, %s15
      // Predicated region
      $region103: #{_gru_pallas.1} parent=5 // pred_check
        %p1885 = pneg %p1884
      $region104: #{_gru_pallas.1} parent=5 // pred_check_branch
        %1887 = sbr.rel (%p1885) target = $region106
      $region105: #{_gru_pallas.1} parent=5 // pred_region
        %s1888 = ssub.s32 %s15, 2
        // Predicated region
        $region107: #{_gru_pallas.1} parent=105 // pred_check
          %p1889 = pneg %p196
        $region108: #{_gru_pallas.1} parent=105 // pred_check_branch
          %1891 = sbr.rel (%p1889) target = $region110
        $region109: #{_gru_pallas.1} parent=105 // pred_region
          %p1892 = scmp.lt.s32.totalorder %s27, 1
          %s1893 = scalar_select %p1892, %s27, 1
          %p1894 = scmp.lt.s32.totalorder %s26, 0
          %s1895 = scalar_select %p1894, %s26, 0
          %s1896 = smul.addr %s1895, 2
          %s1897 = smul.addr %s1893, 2
          %s1898 = sadd.s32 %s1896, %s1897
          %s1899 = smul.addr %s1898, 2
          %s1900 = scalar_lea.vmem %s6, %s1899
        $region110: #{_gru_pallas.1} parent=105 // pred_fallthru
          _
      $region106: #{_gru_pallas.1} parent=5 // pred_fallthru
        _
    $region6: #{_gru_pallas.1} parent=1 // loop_footer
      %s19 = sadd.s32 1, %s15
    $region7: #{_gru_pallas.1} parent=1 // loop_footer_branch
      %14 = sbr.rel target = $region3
    $region8: #{_gru_pallas.1} parent=1 // loop_exit
      _
    %1901 = vsyncpa [#allocation5], 1
    %s1902 = scalar_lea.sflag [#allocation5], 1
    %1903 = vsyncpa %s1902, 1

</llo_original>
